<compile_context>
chip_gen: v7x
topology: tpu7x:2x2x1
jax: 0.10.0
libtpu: 0.0.40
codegen_flags: <defaults>
</compile_context>

<pallas_src>
import functools

import jax
import jax.numpy as jnp
from jax import lax
from jax.experimental import pallas as pl
from jax.experimental.pallas import tpu as pltpu


def _round_up(x, m):
    return ((x + m - 1) // m) * m


def _cdiv(a, b):
    return -(-a // b)


def _vmem_capacity_bytes():
    """Physical VMEM of the current TPU generation (conservative fallback)."""
    try:
        cap = getattr(pltpu.get_tpu_info(), "vmem_capacity_bytes", None)
        if cap:
            return int(cap)
    except Exception:
        pass
    return 64 << 20          # v7x-sized fallback: safe on every generation


# ---------------------------------------------------------------------------
# channel-axis (sublane) softmax helpers
# ---------------------------------------------------------------------------
def _softmax0(x):
    m = jnp.max(x, axis=0, keepdims=True)
    e = jnp.exp(x - m)
    return e * (1.0 / jnp.sum(e, axis=0, keepdims=True))   # one divide per column


def _log_softmax0(x):
    m = jnp.max(x, axis=0, keepdims=True)
    s = x - m
    return s - jnp.log(jnp.sum(jnp.exp(s), axis=0, keepdims=True))


# ---------------------------------------------------------------------------
# Fused CAKD + FNKD kernel: grid = (B, NS, nb)
#   B  : batch              ("parallel")
#   NS : N-axis core split  ("parallel"; 2 when B == 1 -> v7x second TC)
#   nb : N-chunks per split ("arbitrary" — accumulation axis)
# Each step loads one (C, TN) tile of student + teacher logits, accumulates the
# (C, C) Gram matrices on the MXU and a (1, TN) FNKD cross-entropy partial.
# Per-(batch, split) Grams + FNKD scalars are emitted; the tiny cosine /
# normalization epilogue runs in the wrapper.
# ---------------------------------------------------------------------------
def _mskd_cakd_kernel(norms_ref, s_ref, t_ref,
                      s_gram_ref, t_gram_ref, fnkd_ref,
                      s_gram_acc, t_gram_acc, fnkd_acc, *,
                      N, TN, nb, sigmoid, needs_mask):
    split = pl.program_id(1)
    n = pl.program_id(2)

    @pl.when(n == 0)
    def _():
        s_gram_acc[...] = jnp.zeros_like(s_gram_acc)
        t_gram_acc[...] = jnp.zeros_like(t_gram_acc)
        fnkd_acc[...] = jnp.zeros_like(fnkd_acc)

    s = s_ref[...].astype(jnp.float32)            # (C, TN)
    t = t_ref[...].astype(jnp.float32)            # (C, TN)

    if needs_mask:
        col = (split * nb + n) * TN + lax.broadcasted_iota(jnp.int32, (1, TN), 1)
        maskb = col < N                           # (1, TN)
        maskf = maskb.astype(jnp.float32)
        # Sanitize the RAW logits: boundary-block lanes are undefined and could
        # hold NaN/Inf, which would survive a post-hoc `* 0` into the MXU.
        s = jnp.where(maskb, s, 0.0)
        t = jnp.where(maskb, t, 0.0)
    else:
        maskf = None

    # ---- CAKD: channel softmax / sigmoid -> Gram accumulation on the MXU ----
    if sigmoid:
        s_p = jax.nn.sigmoid(s)
        t_p = jax.nn.sigmoid(t)
    else:
        s_p = _softmax0(s)
        t_p = _softmax0(t)
    if maskf is not None:
        s_p = s_p * maskf
        t_p = t_p * maskf

    contract_n = (((1,), (1,)), ((), ()))         # contract N axis, no transpose
    s_gram_acc[...] += lax.dot_general(s_p, s_p, contract_n,
                                       precision=lax.Precision.HIGHEST,
                                       preferred_element_type=jnp.float32)
    t_gram_acc[...] += lax.dot_general(t_p, t_p, contract_n,
                                       precision=lax.Precision.HIGHEST,
                                       preferred_element_type=jnp.float32)

    # ---- FNKD: feature-norm scaled KD cross-entropy, reduced over C per step --
    inv_s = 1.0 / norms_ref[0]                    # one scalar reciprocal each
    inv_t = 1.0 / norms_ref[1]
    xs = s * inv_s
    xt = t * inv_t
    if sigmoid:
        q_fn = jax.nn.sigmoid(xt)
        # nn.CrossEntropyLoss re-applies log_softmax on top of the sigmoid input.
        lsm = _log_softmax0(jax.nn.sigmoid(xs))
        col_ce = -jnp.sum(q_fn * lsm, axis=0, keepdims=True)          # (1, TN)
    else:
        # -sum_c softmax(xt)*log_softmax(xs) == logsumexp(xs) - sum_c softmax(xt)*xs
        # (log_softmax(log_softmax(x)) == log_softmax(x) and sum_c q == 1),
        # so only a (1, TN) partial is ever materialized / accumulated.
        m_xs = jnp.max(xs, axis=0, keepdims=True)
        lse_xs = m_xs + jnp.log(jnp.sum(jnp.exp(xs - m_xs), axis=0, keepdims=True))
        q_fn = _softmax0(xt)
        col_ce = lse_xs - jnp.sum(q_fn * xs, axis=0, keepdims=True)   # (1, TN)
    if maskf is not None:
        col_ce = col_ce * maskf
    fnkd_acc[...] += col_ce

    # ---- finalize this (batch, split) ----------------------------------------
    @pl.when(n == pl.num_programs(2) - 1)
    def _():
        s_gram_ref[...] = s_gram_acc[...]
        t_gram_ref[...] = t_gram_acc[...]
        fnkd_ref[...] = jnp.sum(fnkd_acc[...]).reshape(1, 1)


def mskd_cakd_loss(student_outputs, teacher_outputs,
                   student_features, teacher_features, *,
                   loss_weight=1.0, sigmoid=False,
                   cakd_weight=1.0, fnkd_weight=1.0,
                   lane_tile=None):
    B, C, D, W, H = student_outputs.shape
    N = D * W * H

    # Logits travel to the kernel in their original dtype (cast to f32 in VMEM).
    # TODO(synk): optionally cast f32 logits to bf16 here for v5e (HBM-bound)
    # once the surrounding training loop's accuracy budget allows it.
    s = student_outputs.reshape(B, C, N)
    t = teacher_outputs.reshape(B, C, N)

    # Feature Frobenius norms: pure HBM-bound reduction, plain XLA runs it at
    # roofline — no dedicated pallas_call and no padded feature copies.
    norms = jnp.stack([
        jnp.sqrt(jnp.sum(jnp.square(student_features.astype(jnp.float32)))),
        jnp.sqrt(jnp.sum(jnp.square(teacher_features.astype(jnp.float32)))),
    ])

    # --- N-axis core split: feed v7x's second TensorCore when B == 1 ----------
    NS = 2 if B == 1 else 1

    # --- adaptive lane tile TN -------------------------------------------------
    itemsize = jnp.dtype(s.dtype).itemsize
    C_pad = _round_up(C, 8)                       # VMEM sublane padding
    vmem_budget = min(_vmem_capacity_bytes() // 2, 64 << 20)   # 64 MiB v5e/v6e, 32 MiB v7x
    # VMEM bytes per lane of TN:
    #   2 inputs x 2 pipeline buffers + ~6 live (C, TN) f32 temporaries + acc row.
    per_lane = 2 * 2 * C_pad * itemsize + 6 * C_pad * 4 + 32
    tn_vmem = max(128, ((vmem_budget * 3 // 4) // per_lane) // 128 * 128)
    # >= ~1 MiB of each logits tensor per grid step so the ~0.35us per-step
    # overhead stays well below the DMA time even at small C.
    tn_target = _round_up(max(1, (1 << 20) // (C * itemsize)), 128)

    N_arr = N
    if N < 128:
        # Tiny volume: pad to a single 128-lane tile (negligible copy);
        # the in-kernel mask still uses the true N.
        s = jnp.pad(s, ((0, 0), (0, 0), (0, 128 - N)))
        t = jnp.pad(t, ((0, 0), (0, 0), (0, 128 - N)))
        N_arr = 128

    lanes_per_split = _cdiv(N_arr, NS)
    tn_cap = max(128, (lanes_per_split // 128) * 128)   # tile never exceeds the array
    TN = max(128, min(tn_target, tn_vmem, tn_cap, 32768))
    if lane_tile is not None:                     # test / tuning override
        TN = max(128, min(_round_up(lane_tile, 128), tn_cap))

    nb_total = _cdiv(N_arr, TN)
    if nb_total < NS:
        NS = 1
    nb = _cdiv(nb_total, NS)
    needs_mask = (NS * nb * TN != N)              # ragged tail and/or clamped chunks

    def logits_map(b, split, n):
        # Clamp so chunks past the end re-read the last valid block; the
        # in-kernel column mask zeroes their contribution (no jnp.pad copy).
        return (b, 0, jnp.minimum(split * nb + n, nb_total - 1))

    kernel = functools.partial(_mskd_cakd_kernel, N=N, TN=TN, nb=nb,
                               sigmoid=sigmoid, needs_mask=needs_mask)

    s_gram, t_gram, fnkd_parts = pl.pallas_call(
        kernel,
        out_shape=(jax.ShapeDtypeStruct((B, NS, C, C), jnp.float32),
                   jax.ShapeDtypeStruct((B, NS, C, C), jnp.float32),
                   jax.ShapeDtypeStruct((B, NS, 1, 1), jnp.float32)),
        grid_spec=pltpu.PrefetchScalarGridSpec(
            num_scalar_prefetch=0,
            grid=(B, NS, nb),
            in_specs=[
                pl.BlockSpec(memory_space=pltpu.MemorySpace.SMEM),   # norms (2,)
                pl.BlockSpec((None, C, TN), logits_map),             # student logits
                pl.BlockSpec((None, C, TN), logits_map),             # teacher logits
            ],
            out_specs=(
                pl.BlockSpec((None, None, C, C), lambda b, sp, n: (b, sp, 0, 0)),
                pl.BlockSpec((None, None, C, C), lambda b, sp, n: (b, sp, 0, 0)),
                pl.BlockSpec((None, None, 1, 1), lambda b, sp, n: (b, sp, 0, 0)),
            ),
            scratch_shapes=[pltpu.VMEM((C, C), jnp.float32),   # student Gram acc
                            pltpu.VMEM((C, C), jnp.float32),   # teacher Gram acc
                            pltpu.VMEM((1, TN), jnp.float32)], # FNKD column acc
        ),
        compiler_params=pltpu.CompilerParams(
            dimension_semantics=("parallel", "parallel", "arbitrary"),
            vmem_limit_bytes=int(vmem_budget)),
    )(norms, s, t)

    # --- tiny epilogue: combine splits, cosine similarity, final reductions ----
    S = jnp.sum(s_gram, axis=1)                   # (B, C, C)
    T = jnp.sum(t_gram, axis=1)
    w12 = jnp.sum(S * T, axis=1)                  # (B, C)   cosine over dim 0
    w1 = jnp.sqrt(jnp.sum(S * S, axis=1))
    w2 = jnp.sqrt(jnp.sum(T * T, axis=1))
    cos = w12 / (jnp.maximum(w1, 1e-8) * jnp.maximum(w2, 1e-8))   # torch eps semantics
    cakd_loss = -jnp.sum(cos) / (B * C)
    fnkd_loss = jnp.sum(fnkd_parts) / (B * N)
    return (cakd_weight * cakd_loss + fnkd_weight * fnkd_loss) * loss_weight


# ---------------------------------------------------------------------------
# Pure-JAX reference (mirrors the PyTorch module) for correctness checking.
# ---------------------------------------------------------------------------
def _reference(s_out, t_out, s_feat, t_feat, *, loss_weight, cakd_weight,
               fnkd_weight, sigmoid=False):
    B, C, D, W, H = s_out.shape
    N = D * W * H
    hp = lax.Precision.HIGHEST
    so = s_out.astype(jnp.float32)
    to = t_out.astype(jnp.float32)
    if sigmoid:
        sp = jax.nn.sigmoid(so).reshape(B, C, N)
        tp = jax.nn.sigmoid(to).reshape(B, C, N)
    else:
        sp = jax.nn.softmax(so, axis=1).reshape(B, C, N)
        tp = jax.nn.softmax(to, axis=1).reshape(B, C, N)
    S = jnp.einsum('bcn,bdn->bcd', sp, sp, precision=hp)
    T = jnp.einsum('bcn,bdn->bcd', tp, tp, precision=hp)
    w12 = jnp.sum(S * T, axis=1)
    w1 = jnp.sqrt(jnp.sum(S * S, axis=1))
    w2 = jnp.sqrt(jnp.sum(T * T, axis=1))
    cos = w12 / (jnp.maximum(w1, 1e-8) * jnp.maximum(w2, 1e-8))
    cakd = -jnp.mean(jnp.sum(cos, axis=0) / B)

    s_norm = jnp.sqrt(jnp.sum(s_feat.astype(jnp.float32) ** 2))
    t_norm = jnp.sqrt(jnp.sum(t_feat.astype(jnp.float32) ** 2))
    if sigmoid:
        q = jax.nn.sigmoid(to / t_norm)
        to_kd = jax.nn.sigmoid(so / s_norm)
    else:
        q = jax.nn.softmax(to / t_norm, axis=1)
        to_kd = jax.nn.log_softmax(so / s_norm, axis=1)
    lsm = jax.nn.log_softmax(to_kd, axis=1)       # CrossEntropyLoss re-applies it
    fnkd = jnp.mean(jnp.sum(-q * lsm, axis=1))
    return (cakd_weight * cakd + fnkd_weight * fnkd) * loss_weight


if __name__ == "__main__":
    key = jax.random.PRNGKey(0)
    k1, k2, k3, k4 = jax.random.split(key, 4)

    lw, cw, fw = 0.5, 1.0, 1.0

    # ---- Case 1: lane-aligned volume, B=2, single N chunk, softmax branch ----
    B, C, D, W, H = 2, 4, 4, 8, 8
    s_out = jax.random.normal(k1, (B, C, D, W, H), jnp.float32)
    t_out = jax.random.normal(k2, (B, C, D, W, H), jnp.float32)
    s_feat = jax.random.normal(k3, (B, 8, D, W, H), jnp.float32)
    t_feat = jax.random.normal(k4, (B, 16, D, W, H), jnp.float32)

    loss = mskd_cakd_loss(s_out, t_out, s_feat, t_feat,
                          loss_weight=lw, sigmoid=False,
                          cakd_weight=cw, fnkd_weight=fw)
    loss = jax.block_until_ready(loss)
    ref = _reference(s_out, t_out, s_feat, t_feat, loss_weight=lw,
                     cakd_weight=cw, fnkd_weight=fw, sigmoid=False)
    assert jnp.allclose(loss, ref, rtol=2e-4, atol=1e-5), (loss, ref)

    # ---- Case 2: ragged volume + forced multi-chunk accumulation + mask ------
    D2, W2, H2 = 3, 7, 13
    s_out2 = jax.random.normal(k1, (B, C, D2, W2, H2), jnp.float32)
    t_out2 = jax.random.normal(k2, (B, C, D2, W2, H2), jnp.float32)
    s_feat2 = jax.random.normal(k3, (B, 8, D2, W2, H2), jnp.float32)
    t_feat2 = jax.random.normal(k4, (B, 16, D2, W2, H2), jnp.float32)

    loss2 = mskd_cakd_loss(s_out2, t_out2, s_feat2, t_feat2,
                           loss_weight=lw, sigmoid=False,
                           cakd_weight=cw, fnkd_weight=fw, lane_tile=128)
    loss2 = jax.block_until_ready(loss2)
    ref2 = _reference(s_out2, t_out2, s_feat2, t_feat2, loss_weight=lw,
                      cakd_weight=cw, fnkd_weight=fw, sigmoid=False)
    assert jnp.allclose(loss2, ref2, rtol=2e-4, atol=1e-5), (loss2, ref2)

    # ---- Case 3: B=1 -> N-axis core split (NS=2) + ragged tail + clamp -------
    s_out3, t_out3 = s_out2[:1], t_out2[:1]
    s_feat3, t_feat3 = s_feat2[:1], t_feat2[:1]
    loss3 = mskd_cakd_loss(s_out3, t_out3, s_feat3, t_feat3,
                           loss_weight=lw, sigmoid=False,
                           cakd_weight=cw, fnkd_weight=fw, lane_tile=128)
    loss3 = jax.block_until_ready(loss3)
    ref3 = _reference(s_out3, t_out3, s_feat3, t_feat3, loss_weight=lw,
                      cakd_weight=cw, fnkd_weight=fw, sigmoid=False)
    assert jnp.allclose(loss3, ref3, rtol=2e-4, atol=1e-5), (loss3, ref3)

    # ---- Case 4: sigmoid branch ----------------------------------------------
    loss4 = mskd_cakd_loss(s_out, t_out, s_feat, t_feat,
                           loss_weight=lw, sigmoid=True,
                           cakd_weight=cw, fnkd_weight=fw)
    loss4 = jax.block_until_ready(loss4)
    ref4 = _reference(s_out, t_out, s_feat, t_feat, loss_weight=lw,
                      cakd_weight=cw, fnkd_weight=fw, sigmoid=True)
    assert jnp.allclose(loss4, ref4, rtol=2e-4, atol=1e-5), (loss4, ref4)

    print("KERNEL_OK")
</pallas_src>

<mosaic_0001>
module attributes {stable_mosaic.version = 11 : i64} {
  func.func @_mskd_cakd_kernel(%arg0: i32, %arg1: i32, %arg2: i32, %arg3: memref<2xf32, #tpu.memory_space<smem>>, %arg4: memref<1x4x256xf32, #tpu.memory_space<vmem>>, %arg5: memref<1x4x256xf32, #tpu.memory_space<vmem>>, %arg6: memref<1x1x4x4xf32, #tpu.memory_space<vmem>>, %arg7: memref<1x1x4x4xf32, #tpu.memory_space<vmem>>, %arg8: memref<1x1x1x1xf32, #tpu.memory_space<vmem>>, %arg9: memref<4x4xf32, #tpu.memory_space<vmem>>, %arg10: memref<4x4xf32, #tpu.memory_space<vmem>>, %arg11: memref<1x256xf32, #tpu.memory_space<vmem>>) attributes {dimension_semantics = [#tpu.dimension_semantics<parallel>, #tpu.dimension_semantics<parallel>, #tpu.dimension_semantics<arbitrary>], iteration_bounds = array<i64: 2, 1, 1>, scalar_prefetch = 0 : i64, scratch_operands = 3 : i64, tpu.core_type = #tpu.core_type<tc>, window_params = [{transform_indices = @transform_0, window_bounds = array<i64: 2>}, {transform_indices = @transform_1, window_bounds = array<i64: 1, 4, 256>}, {transform_indices = @transform_2, window_bounds = array<i64: 1, 4, 256>}, {transform_indices = @transform_3, window_bounds = array<i64: 1, 1, 4, 4>}, {transform_indices = @transform_4, window_bounds = array<i64: 1, 1, 4, 4>}, {transform_indices = @transform_5, window_bounds = array<i64: 1, 1, 1, 1>}]} {
    %c0_i32 = arith.constant 0 : i32
    %0 = arith.cmpi eq, %arg2, %c0_i32 : i32
    %1 = arith.extui %0 : i1 to i32
    %c0_i32_0 = arith.constant 0 : i32
    %2 = arith.cmpi ne, %1, %c0_i32_0 : i32
    scf.if %2 {
      %cst_36 = arith.constant 0.000000e+00 : f32
      %75 = vector.broadcast %cst_36 : f32 to vector<4x4xf32>
      %c0_37 = arith.constant 0 : index
      %c0_38 = arith.constant 0 : index
      %76 = vector.load %arg9[%c0_37, %c0_38] : memref<4x4xf32, #tpu.memory_space<vmem>>, vector<4x4xf32>
      tpu.vector_store %arg9[%c0_37, %c0_38], %75 {strides = array<i32>} : memref<4x4xf32, #tpu.memory_space<vmem>>, vector<4x4xf32>,
      %cst_39 = arith.constant 0.000000e+00 : f32
      %77 = vector.broadcast %cst_39 : f32 to vector<4x4xf32>
      %c0_40 = arith.constant 0 : index
      %c0_41 = arith.constant 0 : index
      %78 = vector.load %arg10[%c0_40, %c0_41] : memref<4x4xf32, #tpu.memory_space<vmem>>, vector<4x4xf32>
      tpu.vector_store %arg10[%c0_40, %c0_41], %77 {strides = array<i32>} : memref<4x4xf32, #tpu.memory_space<vmem>>, vector<4x4xf32>,
      %cst_42 = arith.constant 0.000000e+00 : f32
      %79 = vector.broadcast %cst_42 : f32 to vector<1x256xf32>
      %c0_43 = arith.constant 0 : index
      %c0_44 = arith.constant 0 : index
      %80 = vector.load %arg11[%c0_43, %c0_44] : memref<1x256xf32, #tpu.memory_space<vmem>>, vector<1x256xf32>
      tpu.vector_store %arg11[%c0_43, %c0_44], %79 {strides = array<i32>} : memref<1x256xf32, #tpu.memory_space<vmem>>, vector<1x256xf32>,
    } else {
    }
    %c0 = arith.constant 0 : index
    %c0_1 = arith.constant 0 : index
    %c0_2 = arith.constant 0 : index
    %3 = vector.load %arg4[%c0, %c0_1, %c0_2] : memref<1x4x256xf32, #tpu.memory_space<vmem>>, vector<1x4x256xf32>
    %4 = vector.shape_cast %3 : vector<1x4x256xf32> to vector<4x256xf32>
    %c0_3 = arith.constant 0 : index
    %c0_4 = arith.constant 0 : index
    %c0_5 = arith.constant 0 : index
    %5 = vector.load %arg5[%c0_3, %c0_4, %c0_5] : memref<1x4x256xf32, #tpu.memory_space<vmem>>, vector<1x4x256xf32>
    %6 = vector.shape_cast %5 : vector<1x4x256xf32> to vector<4x256xf32>
    %cst = arith.constant dense<0xFF800000> : vector<256xf32>
    %7 = vector.multi_reduction <maximumf>, %4, %cst [0] : vector<4x256xf32> to vector<256xf32>
    %8 = vector.shape_cast %7 : vector<256xf32> to vector<1x256xf32>
    %9 = vector.broadcast %8 : vector<1x256xf32> to vector<4x256xf32>
    %10 = arith.subf %4, %9 : vector<4x256xf32>
    %11 = math.exp %10 : vector<4x256xf32>
    %cst_6 = arith.constant dense<0.000000e+00> : vector<256xf32>
    %12 = vector.multi_reduction <add>, %11, %cst_6 [0] : vector<4x256xf32> to vector<256xf32>
    %13 = vector.shape_cast %12 : vector<256xf32> to vector<1x256xf32>
    %cst_7 = arith.constant 1.000000e+00 : f32
    %14 = vector.broadcast %cst_7 : f32 to vector<1x256xf32>
    %15 = arith.divf %14, %13 : vector<1x256xf32>
    %16 = vector.broadcast %15 : vector<1x256xf32> to vector<4x256xf32>
    %17 = arith.mulf %11, %16 : vector<4x256xf32>
    %cst_8 = arith.constant dense<0xFF800000> : vector<256xf32>
    %18 = vector.multi_reduction <maximumf>, %6, %cst_8 [0] : vector<4x256xf32> to vector<256xf32>
    %19 = vector.shape_cast %18 : vector<256xf32> to vector<1x256xf32>
    %20 = vector.broadcast %19 : vector<1x256xf32> to vector<4x256xf32>
    %21 = arith.subf %6, %20 : vector<4x256xf32>
    %22 = math.exp %21 : vector<4x256xf32>
    %cst_9 = arith.constant dense<0.000000e+00> : vector<256xf32>
    %23 = vector.multi_reduction <add>, %22, %cst_9 [0] : vector<4x256xf32> to vector<256xf32>
    %24 = vector.shape_cast %23 : vector<256xf32> to vector<1x256xf32>
    %cst_10 = arith.constant 1.000000e+00 : f32
    %25 = vector.broadcast %cst_10 : f32 to vector<1x256xf32>
    %26 = arith.divf %25, %24 : vector<1x256xf32>
    %27 = vector.broadcast %26 : vector<1x256xf32> to vector<4x256xf32>
    %28 = arith.mulf %22, %27 : vector<4x256xf32>
    %c0_11 = arith.constant 0 : index
    %c0_12 = arith.constant 0 : index
    %29 = vector.load %arg9[%c0_11, %c0_12] : memref<4x4xf32, #tpu.memory_space<vmem>>, vector<4x4xf32>
    %cst_13 = arith.constant dense<0.000000e+00> : vector<4x4xf32>
    %30 = tpu.matmul %17, %17, %cst_13 {dimension_numbers = #tpu.dot_dimension_numbers<[1], [1], [0], [0], [0, 0, 1, 0], [], []>, precision = #tpu.contract_precision<fp32>} : vector<4x256xf32>, vector<4x256xf32>, vector<4x4xf32> -> vector<4x4xf32>
    %31 = arith.addf %29, %30 : vector<4x4xf32>
    %c0_14 = arith.constant 0 : index
    %c0_15 = arith.constant 0 : index
    %32 = vector.load %arg9[%c0_14, %c0_15] : memref<4x4xf32, #tpu.memory_space<vmem>>, vector<4x4xf32>
    tpu.vector_store %arg9[%c0_14, %c0_15], %31 {strides = array<i32>} : memref<4x4xf32, #tpu.memory_space<vmem>>, vector<4x4xf32>,
    %c0_16 = arith.constant 0 : index
    %c0_17 = arith.constant 0 : index
    %33 = vector.load %arg10[%c0_16, %c0_17] : memref<4x4xf32, #tpu.memory_space<vmem>>, vector<4x4xf32>
    %cst_18 = arith.constant dense<0.000000e+00> : vector<4x4xf32>
    %34 = tpu.matmul %28, %28, %cst_18 {dimension_numbers = #tpu.dot_dimension_numbers<[1], [1], [0], [0], [0, 0, 1, 0], [], []>, precision = #tpu.contract_precision<fp32>} : vector<4x256xf32>, vector<4x256xf32>, vector<4x4xf32> -> vector<4x4xf32>
    %35 = arith.addf %33, %34 : vector<4x4xf32>
    %c0_19 = arith.constant 0 : index
    %c0_20 = arith.constant 0 : index
    %36 = vector.load %arg10[%c0_19, %c0_20] : memref<4x4xf32, #tpu.memory_space<vmem>>, vector<4x4xf32>
    tpu.vector_store %arg10[%c0_19, %c0_20], %35 {strides = array<i32>} : memref<4x4xf32, #tpu.memory_space<vmem>>, vector<4x4xf32>,
    %c0_21 = arith.constant 0 : index
    %37 = memref.load %arg3[%c0_21] : memref<2xf32, #tpu.memory_space<smem>>
    %cst_22 = arith.constant 1.000000e+00 : f32
    %38 = arith.divf %cst_22, %37 : f32
    %c1 = arith.constant 1 : index
    %39 = memref.load %arg3[%c1] : memref<2xf32, #tpu.memory_space<smem>>
    %cst_23 = arith.constant 1.000000e+00 : f32
    %40 = arith.divf %cst_23, %39 : f32
    %41 = vector.broadcast %38 : f32 to vector<4x256xf32>
    %42 = arith.mulf %4, %41 : vector<4x256xf32>
    %43 = vector.broadcast %40 : f32 to vector<4x256xf32>
    %44 = arith.mulf %6, %43 : vector<4x256xf32>
    %cst_24 = arith.constant dense<0xFF800000> : vector<256xf32>
    %45 = vector.multi_reduction <maximumf>, %42, %cst_24 [0] : vector<4x256xf32> to vector<256xf32>
    %46 = vector.shape_cast %45 : vector<256xf32> to vector<1x256xf32>
    %47 = vector.broadcast %46 : vector<1x256xf32> to vector<4x256xf32>
    %48 = arith.subf %42, %47 : vector<4x256xf32>
    %49 = math.exp %48 : vector<4x256xf32>
    %cst_25 = arith.constant dense<0.000000e+00> : vector<256xf32>
    %50 = vector.multi_reduction <add>, %49, %cst_25 [0] : vector<4x256xf32> to vector<256xf32>
    %51 = vector.shape_cast %50 : vector<256xf32> to vector<1x256xf32>
    %52 = math.log %51 : vector<1x256xf32>
    %53 = arith.addf %46, %52 : vector<1x256xf32>
    %cst_26 = arith.constant dense<0xFF800000> : vector<256xf32>
    %54 = vector.multi_reduction <maximumf>, %44, %cst_26 [0] : vector<4x256xf32> to vector<256xf32>
    %55 = vector.shape_cast %54 : vector<256xf32> to vector<1x256xf32>
    %56 = vector.broadcast %55 : vector<1x256xf32> to vector<4x256xf32>
    %57 = arith.subf %44, %56 : vector<4x256xf32>
    %58 = math.exp %57 : vector<4x256xf32>
    %cst_27 = arith.constant dense<0.000000e+00> : vector<256xf32>
    %59 = vector.multi_reduction <add>, %58, %cst_27 [0] : vector<4x256xf32> to vector<256xf32>
    %60 = vector.shape_cast %59 : vector<256xf32> to vector<1x256xf32>
    %cst_28 = arith.constant 1.000000e+00 : f32
    %61 = vector.broadcast %cst_28 : f32 to vector<1x256xf32>
    %62 = arith.divf %61, %60 : vector<1x256xf32>
    %63 = vector.broadcast %62 : vector<1x256xf32> to vector<4x256xf32>
    %64 = arith.mulf %58, %63 : vector<4x256xf32>
    %65 = arith.mulf %64, %42 : vector<4x256xf32>
    %cst_29 = arith.constant dense<0.000000e+00> : vector<256xf32>
    %66 = vector.multi_reduction <add>, %65, %cst_29 [0] : vector<4x256xf32> to vector<256xf32>
    %67 = vector.shape_cast %66 : vector<256xf32> to vector<1x256xf32>
    %68 = arith.subf %53, %67 : vector<1x256xf32>
    %c0_30 = arith.constant 0 : index
    %c0_31 = arith.constant 0 : index
    %69 = vector.load %arg11[%c0_30, %c0_31] : memref<1x256xf32, #tpu.memory_space<vmem>>, vector<1x256xf32>
    %70 = arith.addf %69, %68 : vector<1x256xf32>
    %c0_32 = arith.constant 0 : index
    %c0_33 = arith.constant 0 : index
    %71 = vector.load %arg11[%c0_32, %c0_33] : memref<1x256xf32, #tpu.memory_space<vmem>>, vector<1x256xf32>
    tpu.vector_store %arg11[%c0_32, %c0_33], %70 {strides = array<i32>} : memref<1x256xf32, #tpu.memory_space<vmem>>, vector<1x256xf32>,
    %c0_i32_34 = arith.constant 0 : i32
    %72 = arith.cmpi eq, %arg2, %c0_i32_34 : i32
    %73 = arith.extui %72 : i1 to i32
    %c0_i32_35 = arith.constant 0 : i32
    %74 = arith.cmpi ne, %73, %c0_i32_35 : i32
    scf.if %74 {
      %c0_36 = arith.constant 0 : index
      %c0_37 = arith.constant 0 : index
      %75 = vector.load %arg9[%c0_36, %c0_37] : memref<4x4xf32, #tpu.memory_space<vmem>>, vector<4x4xf32>
      %c0_38 = arith.constant 0 : index
      %c0_39 = arith.constant 0 : index
      %c0_40 = arith.constant 0 : index
      %c0_41 = arith.constant 0 : index
      %76 = vector.load %arg6[%c0_38, %c0_39, %c0_40, %c0_41] : memref<1x1x4x4xf32, #tpu.memory_space<vmem>>, vector<1x1x4x4xf32>
      %77 = vector.shape_cast %76 : vector<1x1x4x4xf32> to vector<4x4xf32>
      %78 = vector.shape_cast %75 : vector<4x4xf32> to vector<1x1x4x4xf32>
      tpu.vector_store %arg6[%c0_38, %c0_39, %c0_40, %c0_41], %78 {strides = array<i32>} : memref<1x1x4x4xf32, #tpu.memory_space<vmem>>, vector<1x1x4x4xf32>,
      %c0_42 = arith.constant 0 : index
      %c0_43 = arith.constant 0 : index
      %79 = vector.load %arg10[%c0_42, %c0_43] : memref<4x4xf32, #tpu.memory_space<vmem>>, vector<4x4xf32>
      %c0_44 = arith.constant 0 : index
      %c0_45 = arith.constant 0 : index
      %c0_46 = arith.constant 0 : index
      %c0_47 = arith.constant 0 : index
      %80 = vector.load %arg7[%c0_44, %c0_45, %c0_46, %c0_47] : memref<1x1x4x4xf32, #tpu.memory_space<vmem>>, vector<1x1x4x4xf32>
      %81 = vector.shape_cast %80 : vector<1x1x4x4xf32> to vector<4x4xf32>
      %82 = vector.shape_cast %79 : vector<4x4xf32> to vector<1x1x4x4xf32>
      tpu.vector_store %arg7[%c0_44, %c0_45, %c0_46, %c0_47], %82 {strides = array<i32>} : memref<1x1x4x4xf32, #tpu.memory_space<vmem>>, vector<1x1x4x4xf32>,
      %c0_48 = arith.constant 0 : index
      %c0_49 = arith.constant 0 : index
      %83 = vector.load %arg11[%c0_48, %c0_49] : memref<1x256xf32, #tpu.memory_space<vmem>>, vector<1x256xf32>
      %84 = vector.shape_cast %83 : vector<1x256xf32> to vector<1x1x256xf32>
      %cst_50 = arith.constant dense<0.000000e+00> : vector<1xf32>
      %85 = vector.multi_reduction <add>, %84, %cst_50 [1, 2] : vector<1x1x256xf32> to vector<1xf32>
      %86 = vector.shape_cast %85 : vector<1xf32> to vector<1x1x1xf32>
      %87 = vector.extract %86[0, 0, 0] : f32 from vector<1x1x1xf32>
      %88 = vector.broadcast %87 : f32 to vector<1x1xf32>
      %c0_51 = arith.constant 0 : index
      %c0_52 = arith.constant 0 : index
      %c0_53 = arith.constant 0 : index
      %c0_54 = arith.constant 0 : index
      %89 = vector.load %arg8[%c0_51, %c0_52, %c0_53, %c0_54] : memref<1x1x1x1xf32, #tpu.memory_space<vmem>>, vector<1x1x1x1xf32>
      %90 = vector.shape_cast %89 : vector<1x1x1x1xf32> to vector<1x1xf32>
      %91 = vector.shape_cast %88 : vector<1x1xf32> to vector<1x1x1x1xf32>
      tpu.vector_store %arg8[%c0_51, %c0_52, %c0_53, %c0_54], %91 {strides = array<i32>} : memref<1x1x1x1xf32, #tpu.memory_space<vmem>>, vector<1x1x1x1xf32>,
    } else {
    }
    return
  }
  func.func @transform_0(%arg0: i32, %arg1: i32, %arg2: i32) -> i32 {
    %c0_i32 = arith.constant 0 : i32
    %c0_i32_0 = arith.constant 0 : i32
    return %c0_i32 : i32
  }
  func.func @transform_1(%arg0: i32, %arg1: i32, %arg2: i32) -> (i32, i32, i32) {
    %c1_i32 = arith.constant 1 : i32
    %0 = arith.muli %arg1, %c1_i32 : i32
    %1 = arith.addi %0, %arg2 : i32
    %c0_i32 = arith.constant 0 : i32
    %2 = arith.minsi %1, %c0_i32 : i32
    %c0_i32_0 = arith.constant 0 : i32
    %c0_i32_1 = arith.constant 0 : i32
    return %arg0, %c0_i32_0, %2 : i32, i32, i32
  }
  func.func @transform_2(%arg0: i32, %arg1: i32, %arg2: i32) -> (i32, i32, i32) {
    %c1_i32 = arith.constant 1 : i32
    %0 = arith.muli %arg1, %c1_i32 : i32
    %1 = arith.addi %0, %arg2 : i32
    %c0_i32 = arith.constant 0 : i32
    %2 = arith.minsi %1, %c0_i32 : i32
    %c0_i32_0 = arith.constant 0 : i32
    %c0_i32_1 = arith.constant 0 : i32
    return %arg0, %c0_i32_0, %2 : i32, i32, i32
  }
  func.func @transform_3(%arg0: i32, %arg1: i32, %arg2: i32) -> (i32, i32, i32, i32) {
    %c0_i32 = arith.constant 0 : i32
    %c0_i32_0 = arith.constant 0 : i32
    %c0_i32_1 = arith.constant 0 : i32
    return %arg0, %arg1, %c0_i32, %c0_i32_0 : i32, i32, i32, i32
  }
  func.func @transform_4(%arg0: i32, %arg1: i32, %arg2: i32) -> (i32, i32, i32, i32) {
    %c0_i32 = arith.constant 0 : i32
    %c0_i32_0 = arith.constant 0 : i32
    %c0_i32_1 = arith.constant 0 : i32
    return %arg0, %arg1, %c0_i32, %c0_i32_0 : i32, i32, i32, i32
  }
  func.func @transform_5(%arg0: i32, %arg1: i32, %arg2: i32) -> (i32, i32, i32, i32) {
    %c0_i32 = arith.constant 0 : i32
    %c0_i32_0 = arith.constant 0 : i32
    %c0_i32_1 = arith.constant 0 : i32
    return %arg0, %arg1, %c0_i32, %c0_i32_0 : i32, i32, i32, i32
  }
}

</mosaic_0001>

<llo_original>
// kernel: tpu_custom_call.1
$region0: #{tpu_custom_call.1}
  #allocation0 [shape = 'u32[]', space=smem, size = 0x4, offset = 0x4, fixed_abs, tag = 'smem constant byte address 0x4 - core index']
  #allocation1 [shape = 'u32[144,128]{1,0:T(1,128)}', space=vmem, size = 0x12000, scoped, tag = 'internal scratch']
  #allocation2 [shape = 'f32[4,4]{1,0:T(4,128)}', space=vmem, size = 0x800, scoped, tag = 'scratch operand']
  #allocation3 [shape = 'f32[4,4]{1,0:T(4,128)}', space=vmem, size = 0x800, scoped, tag = 'scratch operand']
  #allocation4 [shape = 'f32[1,256]{1,0:T(1,128)}', space=vmem, size = 0x400, scoped, tag = 'scratch operand']
  %s0 = inlined_call_operand.hbm [shape: f32[2], index: 0, kind: input, shape index: {}]
  %s1 = inlined_call_operand.hbm [shape: f32[2,4,256], index: 1, kind: input, shape index: {}]
  %s2 = inlined_call_operand.hbm [shape: f32[2,4,256], index: 2, kind: input, shape index: {}]
  %s3 = inlined_call_operand.hbm [shape: f32[2,1,4,4], index: 3, kind: output, shape index: {0}]
  %s4 = inlined_call_operand.hbm [shape: f32[2,1,4,4], index: 4, kind: output, shape index: {1}]
  %s5 = inlined_call_operand.vmem [shape: f32[2,1,1,1], index: 5, kind: output, shape index: {2}]
  %6 = xla_tuple %s3, %s4, %s5
  %s7 = sld [smem:[#allocation0]]
  $region81: #{tpu_custom_call.1} parent=0
    _
  %s9 = ssub.s32 1, %s7
  %s10 = scalar_select 0, %s9, %s7
  $region1: #{tpu_custom_call.1} parent=0
    #allocation5 [shape = 'u8[512]{0}', space=smem, size = 0x200, scoped, tag = 'input window, operand 0, single buffered']
    #allocation6 [shape = 's32[2]{0}', space=sflag, size = 0x8, scoped, tag = 'scoped memory for tpu_custom_call.1']
    #allocation7 [shape = 's32[2]{0}', space=sflag, size = 0x8, scoped, tag = 'scoped memory for tpu_custom_call.1']
    #allocation8 [shape = 's32[2]{0}', space=sflag, size = 0x8, scoped, tag = 'scoped memory for tpu_custom_call.1']
    #allocation9 [shape = 'u8[8192]{0}', space=vmem, size = 0x2000, scoped, tag = 'input window, operand 1']
    #allocation10 [shape = 'u8[8192]{0}', space=vmem, size = 0x2000, scoped, tag = 'input window, operand 2']
    #allocation11 [shape = 's32[2]{0}', space=sflag, size = 0x8, scoped, tag = 'scoped memory for tpu_custom_call.1']
    #allocation12 [shape = 'u8[4096]{0}', space=vmem, size = 0x1000, scoped, tag = 'output window, operand 0']
    #allocation13 [shape = 'u8[4096]{0}', space=vmem, size = 0x1000, scoped, tag = 'output window, operand 1']
    #allocation14 [shape = 's32[2]{0}', space=sflag, size = 0x8, scoped, tag = 'scoped memory for tpu_custom_call.1']
    %11 = vsyncpa [#allocation8], 0
    %12 = vsyncpa [#allocation6], 0
    %s13 = scalar_lea.sflag [#allocation6], 1
    %14 = vsyncpa %s13, 0
    %15 = vsyncpa [#allocation11], 0
    %s16 = scalar_lea.sflag [#allocation11], 1
    %17 = vsyncpa %s16, 0
    %18 = vsyncpa [#allocation7], 0
    %s19 = scalar_lea.sflag [#allocation7], 1
    %20 = vsyncpa %s19, 0
    %21 = vsyncpa [#allocation14], 0
    %s22 = scalar_lea.sflag [#allocation14], 1
    %23 = vsyncpa %s22, 0
    loop: start=0, step=1, limit=4
    $region2: #{tpu_custom_call.1} parent=1 // loop_pre_header
      _
    $region3: #{tpu_custom_call.1} parent=1 // loop_header
      %s25 = sphi 0, %s29
      %p26 = scmp.ge.s32.totalorder %s25, 4
      %s32 = sphi 0, %s51
      %s33 = sphi 0, %s47
      %s34 = sphi 0, %s43
      %s35 = sphi 0, %s32
      %s36 = sphi 0, %s33
      %s37 = sphi 0, %s34
      %s38 = sphi 0, %s35
      %s39 = sphi 0, %s36
      %s40 = sphi 0, %s37
      %s52 = sphi 0, %s52
      %s54 = sphi 0, %s52
      %s55 = sphi 0, %s54
      %s69 = sphi 0, %s55
      %s83 = sphi 0, %s85
      %s86 = sphi 0, %s83
      %s87 = sphi 0, %s86
      %s103 = sphi 0, %s87
      %s117 = sphi 0, %s119
      %s120 = sphi 0, %s117
      %s121 = sphi 0, %s120
      %s137 = sphi 0, %s121
      %s145 = sphi 0, %s147
      %s148 = sphi 0, %s145
      %s149 = sphi 0, %s148
      %s165 = sphi 0, %s149
      %s173 = sphi 0, %s175
      %s176 = sphi 0, %s173
      %s177 = sphi 0, %s176
      %s193 = sphi 0, %s177
      %s201 = sphi 0, %s203
      %s204 = sphi 0, %s201
      %s205 = sphi 0, %s204
      %s221 = sphi 0, %s205
    $region4: #{tpu_custom_call.1} parent=1 // loop_header_branch
      %28 = sbr.rel (%p26) target = $region8
    $region5: #{tpu_custom_call.1} parent=1 // loop_body
      %s30 = ssub.s32 %s25, 1
      %s31 = ssub.s32 %s25, 2
      %s41 = sadd.s32 1, %s34
      %p42 = scmp.ge.s32.totalorder %s41, 1
      %s43 = scalar_select %p42, 0, %s41
      %s44 = sadd.s32 1, %s33
      %s45 = scalar_select %p42, %s44, %s33
      %p46 = scmp.ge.s32.totalorder %s45, 1
      %s47 = scalar_select %p46, 0, %s45
      %s48 = sadd.s32 1, %s32
      %s49 = scalar_select %p46, %s48, %s32
      %p50 = scmp.ge.s32.totalorder %s49, 2
      %s51 = scalar_select %p50, 0, %s49
      %s53 = sadd.s32 %s52, 1
      %p56 = scmp.eq.s32.totalorder %s25, 1
      %p57 = scmp.ne.s32.totalorder %s52, %s54
      %p58 = scmp.eq.s32.totalorder %s25, 0
      %p59 = por %p57, %p58
      %p60 = scmp.ne.s32.totalorder %s52, %s54
      %p61 = scmp.eq.s32.totalorder %s30, 1
      %p62 = por %p60, %p61
      %p63 = scmp.ne.s32.totalorder %s54, %s55
      %p64 = scmp.eq.s32.totalorder %s30, 0
      %p65 = por %p63, %p64
      %p66 = scmp.ne.s32.totalorder %s54, %s55
      %p67 = scmp.eq.s32.totalorder %s31, 1
      %p68 = por %p66, %p67
      %p70 = scmp.ne.s32.totalorder %s55, %s69
      %p71 = scmp.eq.s32.totalorder %s31, 0
      %p72 = por %p70, %p71
      %s73 = sadd.s32 %s33, %s34
      %p74 = scmp.lt.s32.totalorder %s73, 0
      %s75 = scalar_select %p74, %s73, 0
      %s76 = sadd.s32 %s47, %s43
      %p77 = scmp.lt.s32.totalorder %s76, 0
      %s78 = scalar_select %p77, %s76, 0
      %s79 = ssub.s32 %s32, %s51
      %s80 = ssub.s32 %s75, %s78
      %s81 = sor.u32 %s79, %s80
      %p82 = scmp.eq.s32.totalorder %s81, 0
      %s84 = sadd.s32 %s83, 1
      %s85 = scalar_select %p82, %s83, %s84
      %p88 = pneg %p82
      %p89 = scmp.eq.s32.totalorder %s25, 1
      %p90 = por %p88, %p89
      %p91 = scmp.ne.s32.totalorder %s83, %s86
      %p92 = scmp.eq.s32.totalorder %s25, 0
      %p93 = por %p91, %p92
      %p94 = scmp.ne.s32.totalorder %s83, %s86
      %p95 = scmp.eq.s32.totalorder %s30, 1
      %p96 = por %p94, %p95
      %p97 = scmp.ne.s32.totalorder %s86, %s87
      %p98 = scmp.eq.s32.totalorder %s30, 0
      %p99 = por %p97, %p98
      %p100 = scmp.ne.s32.totalorder %s86, %s87
      %p101 = scmp.eq.s32.totalorder %s31, 1
      %p102 = por %p100, %p101
      %p104 = scmp.ne.s32.totalorder %s87, %s103
      %p105 = scmp.eq.s32.totalorder %s31, 0
      %p106 = por %p104, %p105
      %s107 = sadd.s32 %s33, %s34
      %p108 = scmp.lt.s32.totalorder %s107, 0
      %s109 = scalar_select %p108, %s107, 0
      %s110 = sadd.s32 %s47, %s43
      %p111 = scmp.lt.s32.totalorder %s110, 0
      %s112 = scalar_select %p111, %s110, 0
      %s113 = ssub.s32 %s32, %s51
      %s114 = ssub.s32 %s109, %s112
      %s115 = sor.u32 %s113, %s114
      %p116 = scmp.eq.s32.totalorder %s115, 0
      %s118 = sadd.s32 %s117, 1
      %s119 = scalar_select %p116, %s117, %s118
      %p122 = pneg %p116
      %p123 = scmp.eq.s32.totalorder %s25, 1
      %p124 = por %p122, %p123
      %p125 = scmp.ne.s32.totalorder %s117, %s120
      %p126 = scmp.eq.s32.totalorder %s25, 0
      %p127 = por %p125, %p126
      %p128 = scmp.ne.s32.totalorder %s117, %s120
      %p129 = scmp.eq.s32.totalorder %s30, 1
      %p130 = por %p128, %p129
      %p131 = scmp.ne.s32.totalorder %s120, %s121
      %p132 = scmp.eq.s32.totalorder %s30, 0
      %p133 = por %p131, %p132
      %p134 = scmp.ne.s32.totalorder %s120, %s121
      %p135 = scmp.eq.s32.totalorder %s31, 1
      %p136 = por %p134, %p135
      %p138 = scmp.ne.s32.totalorder %s121, %s137
      %p139 = scmp.eq.s32.totalorder %s31, 0
      %p140 = por %p138, %p139
      %s141 = ssub.s32 %s32, %s51
      %s142 = ssub.s32 %s33, %s47
      %s143 = sor.u32 %s141, %s142
      %p144 = scmp.eq.s32.totalorder %s143, 0
      %s146 = sadd.s32 %s145, 1
      %s147 = scalar_select %p144, %s145, %s146
      %p150 = pneg %p144
      %p151 = scmp.eq.s32.totalorder %s25, 1
      %p152 = por %p150, %p151
      %p153 = scmp.ne.s32.totalorder %s145, %s148
      %p154 = scmp.eq.s32.totalorder %s25, 0
      %p155 = por %p153, %p154
      %p156 = scmp.ne.s32.totalorder %s145, %s148
      %p157 = scmp.eq.s32.totalorder %s30, 1
      %p158 = por %p156, %p157
      %p159 = scmp.ne.s32.totalorder %s148, %s149
      %p160 = scmp.eq.s32.totalorder %s30, 0
      %p161 = por %p159, %p160
      %p162 = scmp.ne.s32.totalorder %s148, %s149
      %p163 = scmp.eq.s32.totalorder %s31, 1
      %p164 = por %p162, %p163
      %p166 = scmp.ne.s32.totalorder %s149, %s165
      %p167 = scmp.eq.s32.totalorder %s31, 0
      %p168 = por %p166, %p167
      %s169 = ssub.s32 %s32, %s51
      %s170 = ssub.s32 %s33, %s47
      %s171 = sor.u32 %s169, %s170
      %p172 = scmp.eq.s32.totalorder %s171, 0
      %s174 = sadd.s32 %s173, 1
      %s175 = scalar_select %p172, %s173, %s174
      %p178 = pneg %p172
      %p179 = scmp.eq.s32.totalorder %s25, 1
      %p180 = por %p178, %p179
      %p181 = scmp.ne.s32.totalorder %s173, %s176
      %p182 = scmp.eq.s32.totalorder %s25, 0
      %p183 = por %p181, %p182
      %p184 = scmp.ne.s32.totalorder %s173, %s176
      %p185 = scmp.eq.s32.totalorder %s30, 1
      %p186 = por %p184, %p185
      %p187 = scmp.ne.s32.totalorder %s176, %s177
      %p188 = scmp.eq.s32.totalorder %s30, 0
      %p189 = por %p187, %p188
      %p190 = scmp.ne.s32.totalorder %s176, %s177
      %p191 = scmp.eq.s32.totalorder %s31, 1
      %p192 = por %p190, %p191
      %p194 = scmp.ne.s32.totalorder %s177, %s193
      %p195 = scmp.eq.s32.totalorder %s31, 0
      %p196 = por %p194, %p195
      %s197 = ssub.s32 %s32, %s51
      %s198 = ssub.s32 %s33, %s47
      %s199 = sor.u32 %s197, %s198
      %p200 = scmp.eq.s32.totalorder %s199, 0
      %s202 = sadd.s32 %s201, 1
      %s203 = scalar_select %p200, %s201, %s202
      %p206 = pneg %p200
      %p207 = scmp.eq.s32.totalorder %s25, 1
      %p208 = por %p206, %p207
      %p209 = scmp.ne.s32.totalorder %s201, %s204
      %p210 = scmp.eq.s32.totalorder %s25, 0
      %p211 = por %p209, %p210
      %p212 = scmp.ne.s32.totalorder %s201, %s204
      %p213 = scmp.eq.s32.totalorder %s30, 1
      %p214 = por %p212, %p213
      %p215 = scmp.ne.s32.totalorder %s204, %s205
      %p216 = scmp.eq.s32.totalorder %s30, 0
      %p217 = por %p215, %p216
      %p218 = scmp.ne.s32.totalorder %s204, %s205
      %p219 = scmp.eq.s32.totalorder %s31, 1
      %p220 = por %p218, %p219
      %p222 = scmp.ne.s32.totalorder %s205, %s221
      %p223 = scmp.eq.s32.totalorder %s31, 0
      %p224 = por %p222, %p223
      %p225 = scmp.le.s32.totalorder 1, %s25
      %p226 = scmp.lt.s32.totalorder %s25, 3
      %p227 = pnand %p225, %p226
      %p228 = pneg %p227
      // Predicated region
      $region9: #{tpu_custom_call.1} parent=5 // pred_check
        _
      $region10: #{tpu_custom_call.1} parent=5 // pred_check_branch
        %230 = sbr.rel (%p227) target = $region12
      $region11: #{tpu_custom_call.1} parent=5 // pred_region
        %s231 = ssub.s32 %s25, 1
        // Predicated region
        $region13: #{tpu_custom_call.1} parent=11 // pred_check
          %p232 = pneg %p65
        $region14: #{tpu_custom_call.1} parent=11 // pred_check_branch
          %234 = sbr.rel (%p232) target = $region16
        $region15: #{tpu_custom_call.1} parent=11 // pred_region
          %s236 = ssub.s32 16, 16
          %237 = vsyncadd [#allocation8], %s236
          %240 = dma.hbm_to_smem %s0, 16, [#allocation5], [#allocation8]
        $region16: #{tpu_custom_call.1} parent=11 // pred_fallthru
          _
      $region12: #{tpu_custom_call.1} parent=5 // pred_fallthru
        _
      %p241 = scmp.lt.s32.totalorder %s25, 2
      // Predicated region
      $region17: #{tpu_custom_call.1} parent=5 // pred_check
        %p242 = pneg %p241
      $region18: #{tpu_custom_call.1} parent=5 // pred_check_branch
        %244 = sbr.rel (%p242) target = $region20
      $region19: #{tpu_custom_call.1} parent=5 // pred_region
        // Predicated region
        $region21: #{tpu_custom_call.1} parent=19 // pred_check
          %p245 = pneg %p93
        $region22: #{tpu_custom_call.1} parent=19 // pred_check_branch
          %247 = sbr.rel (%p245) target = $region24
        $region23: #{tpu_custom_call.1} parent=19 // pred_region
          %s248 = sand.u32 %s83, 1
          %s249 = scalar_lea.sflag [#allocation6], %s248
          %s250 = sand.u32 %s83, 1
          %s251 = smul.addr %s250, 8
          %s252 = scalar_lea.vmem [#allocation9], %s251
          %s253 = sadd.s32 %s33, %s34
          %p254 = scmp.lt.s32.totalorder %s253, 0
          %s255 = scalar_select %p254, %s253, 0
          %s256 = smul.u32 2, %s255
          %s258 = ssub.s32 128, 128
          %259 = vsyncadd %s249, %s258
          %s260 = smul.addr %s32, 2
          %s261 = sadd.s32 %s256, %s260
          %s262 = smul.addr %s261, 64
          %s263 = scalar_lea.hbm %s1, %s262
          %s265 = sshll.u32 %s252, 4
          %s266 = int_to_ptr.vmem [resolvable:$true] %s265
          %268 = dma.hbm_to_vmem [thread:$0]  %s263, 128, %s266, %s249
        $region24: #{tpu_custom_call.1} parent=19 // pred_fallthru
          _
        // Predicated region
        $region25: #{tpu_custom_call.1} parent=19 // pred_check
          %p269 = pneg %p127
        $region26: #{tpu_custom_call.1} parent=19 // pred_check_branch
          %271 = sbr.rel (%p269) target = $region28
        $region27: #{tpu_custom_call.1} parent=19 // pred_region
          %s272 = sand.u32 %s117, 1
          %s273 = scalar_lea.sflag [#allocation11], %s272
          %s274 = sand.u32 %s117, 1
          %s275 = smul.addr %s274, 8
          %s276 = scalar_lea.vmem [#allocation10], %s275
          %s277 = sadd.s32 %s33, %s34
          %p278 = scmp.lt.s32.totalorder %s277, 0
          %s279 = scalar_select %p278, %s277, 0
          %s280 = smul.u32 2, %s279
          %s282 = ssub.s32 128, 128
          %283 = vsyncadd %s273, %s282
          %s284 = smul.addr %s32, 2
          %s285 = sadd.s32 %s280, %s284
          %s286 = smul.addr %s285, 64
          %s287 = scalar_lea.hbm %s2, %s286
          %s289 = sshll.u32 %s276, 4
          %s290 = int_to_ptr.vmem [resolvable:$true] %s289
          %292 = dma.hbm_to_vmem [thread:$0]  %s287, 128, %s290, %s273
        $region28: #{tpu_custom_call.1} parent=19 // pred_fallthru
          _
      $region20: #{tpu_custom_call.1} parent=5 // pred_fallthru
        _
      %p293 = scmp.le.s32.totalorder 1, %s25
      %p294 = scmp.lt.s32.totalorder %s25, 3
      %p295 = pnand %p293, %p294
      %p296 = pneg %p295
      // Predicated region
      $region29: #{tpu_custom_call.1} parent=5 // pred_check
        _
      $region30: #{tpu_custom_call.1} parent=5 // pred_check_branch
        %298 = sbr.rel (%p295) target = $region32
      $region31: #{tpu_custom_call.1} parent=5 // pred_region
        %s299 = ssub.s32 %s25, 1
        // Predicated region
        $region33: #{tpu_custom_call.1} parent=31 // pred_check
          %p300 = pneg %p65
        $region34: #{tpu_custom_call.1} parent=31 // pred_check_branch
          %302 = sbr.rel (%p300) target = $region36
        $region35: #{tpu_custom_call.1} parent=31 // pred_region
          %303 = dma.done [#allocation8], 16
        $region36: #{tpu_custom_call.1} parent=31 // pred_fallthru
          _
        %s304 = sand.u32 %s86, 1
        %s305 = scalar_lea.sflag [#allocation6], %s304
        %s306 = sand.u32 %s86, 1
        %s307 = smul.addr %s306, 8
        %s308 = scalar_lea.vmem [#allocation9], %s307
        // Predicated region
        $region37: #{tpu_custom_call.1} parent=31 // pred_check
          %p309 = pneg %p99
        $region38: #{tpu_custom_call.1} parent=31 // pred_check_branch
          %311 = sbr.rel (%p309) target = $region40
        $region39: #{tpu_custom_call.1} parent=31 // pred_region
          %312 = dma.done %s305, 128
        $region40: #{tpu_custom_call.1} parent=31 // pred_fallthru
          _
        %s313 = sand.u32 %s120, 1
        %s314 = scalar_lea.sflag [#allocation11], %s313
        %s315 = sand.u32 %s120, 1
        %s316 = smul.addr %s315, 8
        %s317 = scalar_lea.vmem [#allocation10], %s316
        // Predicated region
        $region41: #{tpu_custom_call.1} parent=31 // pred_check
          %p318 = pneg %p133
        $region42: #{tpu_custom_call.1} parent=31 // pred_check_branch
          %320 = sbr.rel (%p318) target = $region44
        $region43: #{tpu_custom_call.1} parent=31 // pred_region
          %321 = dma.done %s314, 128
        $region44: #{tpu_custom_call.1} parent=31 // pred_fallthru
          _
        %322 = sfence
        %p323 = pneg %p65
        %p324 = pneg %p62
        %s325 = sand.u32 %s86, 1
        %s326 = scalar_lea.sflag [#allocation6], %s325
        %s327 = sand.u32 %s86, 1
        %s328 = smul.addr %s327, 8
        %s329 = scalar_lea.vmem [#allocation9], %s328
        %p330 = pneg %p99
        %p331 = pneg %p96
        %s332 = sand.u32 %s120, 1
        %s333 = scalar_lea.sflag [#allocation11], %s332
        %s334 = sand.u32 %s120, 1
        %s335 = smul.addr %s334, 8
        %s336 = scalar_lea.vmem [#allocation10], %s335
        %p337 = pneg %p133
        %p338 = pneg %p130
        %p339 = pneg %p161
        %p340 = pneg %p158
        %s341 = sand.u32 %s148, 1
        %s342 = scalar_lea.sflag [#allocation7], %s341
        %s343 = sand.u32 %s148, 1
        %s344 = smul.addr %s343, 4
        %s345 = scalar_lea.vmem [#allocation12], %s344
        %p346 = pneg %p189
        %p347 = pneg %p186
        %s348 = sand.u32 %s176, 1
        %s349 = scalar_lea.sflag [#allocation14], %s348
        %s350 = sand.u32 %s176, 1
        %s351 = smul.addr %s350, 4
        %s352 = scalar_lea.vmem [#allocation13], %s351
        %p353 = pneg %p217
        %p354 = pneg %p214
        %p355 = scmp.lt.s32.totalorder %s35, 1
        %s356 = scalar_select %p355, %s35, 1
        %p357 = scmp.lt.s32.totalorder %s36, 0
        %s358 = scalar_select %p357, %s36, 0
        %s359 = sadd.s32 %s358, %s356
        %s360 = scalar_lea.vmem %s5, %s359
        %s361 = sadd.s32 %s36, %s37
        %p362 = scmp.lt.s32.totalorder %s361, 0
        %s363 = scalar_select %p362, %s361, 0
        %s364 = smul.u32 2, %s363
        %s365 = sadd.s32 %s36, %s37
        %p366 = scmp.lt.s32.totalorder %s365, 0
        %s367 = scalar_select %p366, %s365, 0
        %s368 = smul.u32 2, %s367
        %p369 = scmp.lt.s32.totalorder %s35, 1
        %s370 = scalar_select %p369, %s35, 1
        %p371 = scmp.lt.s32.totalorder %s36, 0
        %s372 = scalar_select %p371, %s36, 0
        %s373 = sadd.s32 %s372, %s370
        %s374 = scalar_lea.vmem %s5, %s373
        %p375 = scmp.eq.s32.totalorder %s37, 0
        // Predicated region
        $region45: #{tpu_custom_call.1} parent=31 // pred_check
          %p376 = pneg %p375
        $region46: #{tpu_custom_call.1} parent=31 // pred_check_branch
          %378 = sbr.rel (%p376) target = $region48
        $region47: #{tpu_custom_call.1} parent=31 // pred_region
          %vm379 = vcmask 27648
          %380 = vst.msk [vmem:[#allocation2] sm:$0xf] %vm379, 0.0
          %381 = vst.msk [vmem:[#allocation3] sm:$0xf] %vm379, 0.0
          %v382 = vlaneseq
          %vm383 = vcmp.ge.s32.totalorder %v382, 0
          %vm384 = vcmp.lt.s32.totalorder %v382, 256
          %vm385 = vmand %vm383, %vm384
          %386 = vst.msk [vmem:[#allocation4] sm:$0x3] %vm385, 0.0
        $region48: #{tpu_custom_call.1} parent=31 // pred_fallthru
          _
        %v387 = vld [vmem:[%s308] sm:$0xff]
        %v388 = vld [vmem:[%s317] sm:$0xff]
        %v390 = vcombine.high %v387, %v387
        %vm392 = vcmask 1043456
        %v393 = vsel %vm392, %v387, -inf
        %v394 = vrot.slane %v393, 4
        %v395 = vmax.f32 %v393, %v394
        %v396 = vrot.slane %v395, 2
        %v397 = vmax.f32 %v395, %v396
        %v398 = vrot.slane %v397, 1
        %v399 = vmax.f32 %v397, %v398
        %v400 = vsel %vm392, %v390, -inf
        %v401 = vrot.slane %v400, 4
        %v402 = vmax.f32 %v400, %v401
        %v403 = vrot.slane %v402, 2
        %v404 = vmax.f32 %v402, %v403
        %v405 = vrot.slane %v404, 1
        %v406 = vmax.f32 %v404, %v405
        %v409 = vcombine.low %v399, %v406
        %v411 = vsub.f32 %v387, %v409
        %v412 = vmul.f32 %v411, 1.442695
        %v413 = vpow.pop %v412
        %v415 = vcombine.high %v413, %v413
        %v417 = vsel %vm392, %v413, 0.0
        %v418 = vrot.slane %v417, 4
        %v419 = vadd.f32 %v417, %v418
        %v420 = vrot.slane %v419, 2
        %v421 = vadd.f32 %v419, %v420
        %v422 = vrot.slane %v421, 1
        %v423 = vadd.f32 %v421, %v422
        %v424 = vsel %vm392, %v415, 0.0
        %v425 = vrot.slane %v424, 4
        %v426 = vadd.f32 %v424, %v425
        %v427 = vrot.slane %v426, 2
        %v428 = vadd.f32 %v426, %v427
        %v429 = vrot.slane %v428, 1
        %v430 = vadd.f32 %v428, %v429
        %v431 = vrcp.pop %v423
        %v432 = vmul.f32 1.0, %v431
        %v433 = vrcp.pop %v430
        %v434 = vmul.f32 1.0, %v433
        %v437 = vcombine.low %v432, %v434
        %v439 = vmul.f32 %v413, %v437
        %v441 = vcombine.high %v388, %v388
        %v443 = vsel %vm392, %v388, -inf
        %v444 = vrot.slane %v443, 4
        %v445 = vmax.f32 %v443, %v444
        %v446 = vrot.slane %v445, 2
        %v447 = vmax.f32 %v445, %v446
        %v448 = vrot.slane %v447, 1
        %v449 = vmax.f32 %v447, %v448
        %v450 = vsel %vm392, %v441, -inf
        %v451 = vrot.slane %v450, 4
        %v452 = vmax.f32 %v450, %v451
        %v453 = vrot.slane %v452, 2
        %v454 = vmax.f32 %v452, %v453
        %v455 = vrot.slane %v454, 1
        %v456 = vmax.f32 %v454, %v455
        %v459 = vcombine.low %v449, %v456
        %v461 = vsub.f32 %v388, %v459
        %v462 = vmul.f32 %v461, 1.442695
        %v463 = vpow.pop %v462
        %v465 = vcombine.high %v463, %v463
        %v467 = vsel %vm392, %v463, 0.0
        %v468 = vrot.slane %v467, 4
        %v469 = vadd.f32 %v467, %v468
        %v470 = vrot.slane %v469, 2
        %v471 = vadd.f32 %v469, %v470
        %v472 = vrot.slane %v471, 1
        %v473 = vadd.f32 %v471, %v472
        %v474 = vsel %vm392, %v465, 0.0
        %v475 = vrot.slane %v474, 4
        %v476 = vadd.f32 %v474, %v475
        %v477 = vrot.slane %v476, 2
        %v478 = vadd.f32 %v476, %v477
        %v479 = vrot.slane %v478, 1
        %v480 = vadd.f32 %v478, %v479
        %v481 = vrcp.pop %v473
        %v482 = vmul.f32 1.0, %v481
        %v483 = vrcp.pop %v480
        %v484 = vmul.f32 1.0, %v483
        %v487 = vcombine.low %v482, %v484
        %v489 = vmul.f32 %v463, %v487
        %v490 = vld [vmem:[#allocation2] sm:$0xf]
        %v492 = vcombine.high %v439, %v439
        %v494 = vand.u32 %v492, 4294901760
        %495 = vmatprep.subr.mxu0 %v494
        %v496 = vand.u32 %v439, 4294901760
        %497 = vmatpush1.xpose.msra.mxu0 %v496
        %498 = vmatprep.subr.mxu0 0.0
        %499 = vmatpush1.xpose.msra.mxu0 0.0
        %500 = vmatprep.subr.mxu0 0.0
        %501 = vmatpush1.xpose.msra.mxu0 0.0
        %502 = vmatprep.subr.mxu0 0.0
        %503 = vmatpush1.xpose.msra.mxu0 0.0
        %504 = vmatprep.subr.mxu0 0.0
        %505 = vmatpush1.xpose.msra.mxu0 0.0
        %506 = vmatprep.subr.mxu0 0.0
        %507 = vmatpush1.xpose.msra.mxu0 0.0
        %508 = vmatprep.subr.mxu0 0.0
        %509 = vmatpush1.xpose.msra.mxu0 0.0
        %510 = vmatprep.subr.mxu0 0.0
        %511 = vmatpush1.xpose.msra.mxu0 0.0
        %512 = vmatprep.subr.mxu0 0.0
        %513 = vmatpush1.xpose.msra.mxu0 0.0
        %514 = vmatprep.subr.mxu0 0.0
        %515 = vmatpush1.xpose.msra.mxu0 0.0
        %516 = vmatprep.subr.mxu0 0.0
        %517 = vmatpush1.xpose.msra.mxu0 0.0
        %518 = vmatprep.subr.mxu0 0.0
        %519 = vmatpush1.xpose.msra.mxu0 0.0
        %520 = vmatprep.subr.mxu0 0.0
        %521 = vmatpush1.xpose.msra.mxu0 0.0
        %522 = vmatprep.subr.mxu0 0.0
        %523 = vmatpush1.xpose.msra.mxu0 0.0
        %524 = vmatprep.subr.mxu0 0.0
        %525 = vmatpush1.xpose.msra.mxu0 0.0
        %526 = vmatprep.subr.mxu0 0.0
        %527 = vmatpush1.xpose.msra.mxu0 0.0
        %528 = vmatprep.subr.mxu0 0.0
        %529 = vmatpush1.xpose.msra.mxu0 0.0
        %530 = vmatprep.subr.mxu0 0.0
        %531 = vmatpush1.xpose.msra.mxu0 0.0
        %532 = vmatprep.subr.mxu0 0.0
        %533 = vmatpush1.xpose.msra.mxu0 0.0
        %534 = vmatprep.subr.mxu0 0.0
        %535 = vmatpush1.xpose.msra.mxu0 0.0
        %536 = vmatprep.subr.mxu0 0.0
        %537 = vmatpush1.xpose.msra.mxu0 0.0
        %538 = vmatprep.subr.mxu0 0.0
        %539 = vmatpush1.xpose.msra.mxu0 0.0
        %540 = vmatprep.subr.mxu0 0.0
        %541 = vmatpush1.xpose.msra.mxu0 0.0
        %542 = vmatprep.subr.mxu0 0.0
        %543 = vmatpush1.xpose.msra.mxu0 0.0
        %544 = vmatprep.subr.mxu0 0.0
        %545 = vmatpush1.xpose.msra.mxu0 0.0
        %546 = vmatprep.subr.mxu0 0.0
        %547 = vmatpush1.xpose.msra.mxu0 0.0
        %548 = vmatprep.subr.mxu0 0.0
        %549 = vmatpush1.xpose.msra.mxu0 0.0
        %550 = vmatprep.subr.mxu0 0.0
        %551 = vmatpush1.xpose.msra.mxu0 0.0
        %552 = vmatprep.subr.mxu0 0.0
        %553 = vmatpush1.xpose.msra.mxu0 0.0
        %554 = vmatprep.subr.mxu0 0.0
        %555 = vmatpush1.xpose.msra.mxu0 0.0
        %556 = vmatprep.subr.mxu0 0.0
        %557 = vmatpush1.xpose.msra.mxu0 0.0
        %558 = vmatprep.subr.mxu0 0.0
        %559 = vmatpush1.xpose.msra.mxu0 0.0
        %v560 = vand.u32 %v492, 4294901760
        %v561 = vsub.f32 %v492, %v560
        %v562 = vand.u32 %v561, 4294901760
        %v563 = vsub.f32 %v561, %v562
        %v564 = vand.u32 %v563, 4294901760
        %565 = vmatprep.mubr.f32.mxu0 %v564
        %v566 = vand.u32 %v439, 4294901760
        %v567 = vsub.f32 %v439, %v566
        %v568 = vand.u32 %v567, 4294901760
        %v569 = vsub.f32 %v567, %v568
        %v570 = vand.u32 %v569, 4294901760
        %571 = vmatmul.mubr.f32.gmra.mrb[0].mxu0 %v570
        %v572 = vpop.f32.mrb[0].mxu0
        %v573 = vadd.f32 0.0, %v572
        %v574 = vpop.f32.mrb[0].mxu0
        %575 = vdwg.mxu0
        %v576 = vand.u32 %v492, 4294901760
        %v577 = vsub.f32 %v492, %v576
        %v578 = vand.u32 %v577, 4294901760
        %v579 = vsub.f32 %v577, %v578
        %v580 = vand.u32 %v579, 4294901760
        %581 = vmatprep.subr.mxu0 %v580
        %v582 = vand.u32 %v439, 4294901760
        %v583 = vsub.f32 %v439, %v582
        %v584 = vand.u32 %v583, 4294901760
        %v585 = vsub.f32 %v583, %v584
        %v586 = vand.u32 %v585, 4294901760
        %587 = vmatpush1.xpose.msra.mxu0 %v586
        %588 = vmatprep.subr.mxu0 0.0
        %589 = vmatpush1.xpose.msra.mxu0 0.0
        %590 = vmatprep.subr.mxu0 0.0
        %591 = vmatpush1.xpose.msra.mxu0 0.0
        %592 = vmatprep.subr.mxu0 0.0
        %593 = vmatpush1.xpose.msra.mxu0 0.0
        %594 = vmatprep.subr.mxu0 0.0
        %595 = vmatpush1.xpose.msra.mxu0 0.0
        %596 = vmatprep.subr.mxu0 0.0
        %597 = vmatpush1.xpose.msra.mxu0 0.0
        %598 = vmatprep.subr.mxu0 0.0
        %599 = vmatpush1.xpose.msra.mxu0 0.0
        %600 = vmatprep.subr.mxu0 0.0
        %601 = vmatpush1.xpose.msra.mxu0 0.0
        %602 = vmatprep.subr.mxu0 0.0
        %603 = vmatpush1.xpose.msra.mxu0 0.0
        %604 = vmatprep.subr.mxu0 0.0
        %605 = vmatpush1.xpose.msra.mxu0 0.0
        %606 = vmatprep.subr.mxu0 0.0
        %607 = vmatpush1.xpose.msra.mxu0 0.0
        %608 = vmatprep.subr.mxu0 0.0
        %609 = vmatpush1.xpose.msra.mxu0 0.0
        %610 = vmatprep.subr.mxu0 0.0
        %611 = vmatpush1.xpose.msra.mxu0 0.0
        %612 = vmatprep.subr.mxu0 0.0
        %613 = vmatpush1.xpose.msra.mxu0 0.0
        %614 = vmatprep.subr.mxu0 0.0
        %615 = vmatpush1.xpose.msra.mxu0 0.0
        %616 = vmatprep.subr.mxu0 0.0
        %617 = vmatpush1.xpose.msra.mxu0 0.0
        %618 = vmatprep.subr.mxu0 0.0
        %619 = vmatpush1.xpose.msra.mxu0 0.0
        %620 = vmatprep.subr.mxu0 0.0
        %621 = vmatpush1.xpose.msra.mxu0 0.0
        %622 = vmatprep.subr.mxu0 0.0
        %623 = vmatpush1.xpose.msra.mxu0 0.0
        %624 = vmatprep.subr.mxu0 0.0
        %625 = vmatpush1.xpose.msra.mxu0 0.0
        %626 = vmatprep.subr.mxu0 0.0
        %627 = vmatpush1.xpose.msra.mxu0 0.0
        %628 = vmatprep.subr.mxu0 0.0
        %629 = vmatpush1.xpose.msra.mxu0 0.0
        %630 = vmatprep.subr.mxu0 0.0
        %631 = vmatpush1.xpose.msra.mxu0 0.0
        %632 = vmatprep.subr.mxu0 0.0
        %633 = vmatpush1.xpose.msra.mxu0 0.0
        %634 = vmatprep.subr.mxu0 0.0
        %635 = vmatpush1.xpose.msra.mxu0 0.0
        %636 = vmatprep.subr.mxu0 0.0
        %637 = vmatpush1.xpose.msra.mxu0 0.0
        %638 = vmatprep.subr.mxu0 0.0
        %639 = vmatpush1.xpose.msra.mxu0 0.0
        %640 = vmatprep.subr.mxu0 0.0
        %641 = vmatpush1.xpose.msra.mxu0 0.0
        %642 = vmatprep.subr.mxu0 0.0
        %643 = vmatpush1.xpose.msra.mxu0 0.0
        %644 = vmatprep.subr.mxu0 0.0
        %645 = vmatpush1.xpose.msra.mxu0 0.0
        %646 = vmatprep.subr.mxu0 0.0
        %647 = vmatpush1.xpose.msra.mxu0 0.0
        %648 = vmatprep.subr.mxu0 0.0
        %649 = vmatpush1.xpose.msra.mxu0 0.0
        %v650 = vand.u32 %v492, 4294901760
        %651 = vmatprep.mubr.f32.mxu0 %v650
        %v652 = vand.u32 %v439, 4294901760
        %653 = vmatmul.mubr.f32.gmra.mrb[0].mxu0 %v652
        %v654 = vpop.f32.mrb[0].mxu0
        %v655 = vadd.f32 %v573, %v654
        %v656 = vpop.f32.mrb[0].mxu0
        %657 = vdwg.mxu0
        %v658 = vand.u32 %v492, 4294901760
        %v659 = vsub.f32 %v492, %v658
        %660 = vmatprep.subr.mxu0 %v659
        %v661 = vand.u32 %v439, 4294901760
        %v662 = vsub.f32 %v439, %v661
        %663 = vmatpush1.xpose.msra.mxu0 %v662
        %664 = vmatprep.subr.mxu0 0.0
        %665 = vmatpush1.xpose.msra.mxu0 0.0
        %666 = vmatprep.subr.mxu0 0.0
        %667 = vmatpush1.xpose.msra.mxu0 0.0
        %668 = vmatprep.subr.mxu0 0.0
        %669 = vmatpush1.xpose.msra.mxu0 0.0
        %670 = vmatprep.subr.mxu0 0.0
        %671 = vmatpush1.xpose.msra.mxu0 0.0
        %672 = vmatprep.subr.mxu0 0.0
        %673 = vmatpush1.xpose.msra.mxu0 0.0
        %674 = vmatprep.subr.mxu0 0.0
        %675 = vmatpush1.xpose.msra.mxu0 0.0
        %676 = vmatprep.subr.mxu0 0.0
        %677 = vmatpush1.xpose.msra.mxu0 0.0
        %678 = vmatprep.subr.mxu0 0.0
        %679 = vmatpush1.xpose.msra.mxu0 0.0
        %680 = vmatprep.subr.mxu0 0.0
        %681 = vmatpush1.xpose.msra.mxu0 0.0
        %682 = vmatprep.subr.mxu0 0.0
        %683 = vmatpush1.xpose.msra.mxu0 0.0
        %684 = vmatprep.subr.mxu0 0.0
        %685 = vmatpush1.xpose.msra.mxu0 0.0
        %686 = vmatprep.subr.mxu0 0.0
        %687 = vmatpush1.xpose.msra.mxu0 0.0
        %688 = vmatprep.subr.mxu0 0.0
        %689 = vmatpush1.xpose.msra.mxu0 0.0
        %690 = vmatprep.subr.mxu0 0.0
        %691 = vmatpush1.xpose.msra.mxu0 0.0
        %692 = vmatprep.subr.mxu0 0.0
        %693 = vmatpush1.xpose.msra.mxu0 0.0
        %694 = vmatprep.subr.mxu0 0.0
        %695 = vmatpush1.xpose.msra.mxu0 0.0
        %696 = vmatprep.subr.mxu0 0.0
        %697 = vmatpush1.xpose.msra.mxu0 0.0
        %698 = vmatprep.subr.mxu0 0.0
        %699 = vmatpush1.xpose.msra.mxu0 0.0
        %700 = vmatprep.subr.mxu0 0.0
        %701 = vmatpush1.xpose.msra.mxu0 0.0
        %702 = vmatprep.subr.mxu0 0.0
        %703 = vmatpush1.xpose.msra.mxu0 0.0
        %704 = vmatprep.subr.mxu0 0.0
        %705 = vmatpush1.xpose.msra.mxu0 0.0
        %706 = vmatprep.subr.mxu0 0.0
        %707 = vmatpush1.xpose.msra.mxu0 0.0
        %708 = vmatprep.subr.mxu0 0.0
        %709 = vmatpush1.xpose.msra.mxu0 0.0
        %710 = vmatprep.subr.mxu0 0.0
        %711 = vmatpush1.xpose.msra.mxu0 0.0
        %712 = vmatprep.subr.mxu0 0.0
        %713 = vmatpush1.xpose.msra.mxu0 0.0
        %714 = vmatprep.subr.mxu0 0.0
        %715 = vmatpush1.xpose.msra.mxu0 0.0
        %716 = vmatprep.subr.mxu0 0.0
        %717 = vmatpush1.xpose.msra.mxu0 0.0
        %718 = vmatprep.subr.mxu0 0.0
        %719 = vmatpush1.xpose.msra.mxu0 0.0
        %720 = vmatprep.subr.mxu0 0.0
        %721 = vmatpush1.xpose.msra.mxu0 0.0
        %722 = vmatprep.subr.mxu0 0.0
        %723 = vmatpush1.xpose.msra.mxu0 0.0
        %724 = vmatprep.subr.mxu0 0.0
        %725 = vmatpush1.xpose.msra.mxu0 0.0
        %v726 = vand.u32 %v492, 4294901760
        %v727 = vsub.f32 %v492, %v726
        %728 = vmatprep.mubr.f32.mxu0 %v727
        %v729 = vand.u32 %v439, 4294901760
        %v730 = vsub.f32 %v439, %v729
        %731 = vmatmul.mubr.f32.gmra.mrb[0].mxu0 %v730
        %v732 = vpop.f32.mrb[0].mxu0
        %v733 = vadd.f32 %v655, %v732
        %v734 = vpop.f32.mrb[0].mxu0
        %735 = vdwg.mxu0
        %v736 = vand.u32 %v492, 4294901760
        %737 = vmatprep.subr.mxu0 %v736
        %v738 = vand.u32 %v439, 4294901760
        %739 = vmatpush1.xpose.msra.mxu0 %v738
        %740 = vmatprep.subr.mxu0 0.0
        %741 = vmatpush1.xpose.msra.mxu0 0.0
        %742 = vmatprep.subr.mxu0 0.0
        %743 = vmatpush1.xpose.msra.mxu0 0.0
        %744 = vmatprep.subr.mxu0 0.0
        %745 = vmatpush1.xpose.msra.mxu0 0.0
        %746 = vmatprep.subr.mxu0 0.0
        %747 = vmatpush1.xpose.msra.mxu0 0.0
        %748 = vmatprep.subr.mxu0 0.0
        %749 = vmatpush1.xpose.msra.mxu0 0.0
        %750 = vmatprep.subr.mxu0 0.0
        %751 = vmatpush1.xpose.msra.mxu0 0.0
        %752 = vmatprep.subr.mxu0 0.0
        %753 = vmatpush1.xpose.msra.mxu0 0.0
        %754 = vmatprep.subr.mxu0 0.0
        %755 = vmatpush1.xpose.msra.mxu0 0.0
        %756 = vmatprep.subr.mxu0 0.0
        %757 = vmatpush1.xpose.msra.mxu0 0.0
        %758 = vmatprep.subr.mxu0 0.0
        %759 = vmatpush1.xpose.msra.mxu0 0.0
        %760 = vmatprep.subr.mxu0 0.0
        %761 = vmatpush1.xpose.msra.mxu0 0.0
        %762 = vmatprep.subr.mxu0 0.0
        %763 = vmatpush1.xpose.msra.mxu0 0.0
        %764 = vmatprep.subr.mxu0 0.0
        %765 = vmatpush1.xpose.msra.mxu0 0.0
        %766 = vmatprep.subr.mxu0 0.0
        %767 = vmatpush1.xpose.msra.mxu0 0.0
        %768 = vmatprep.subr.mxu0 0.0
        %769 = vmatpush1.xpose.msra.mxu0 0.0
        %770 = vmatprep.subr.mxu0 0.0
        %771 = vmatpush1.xpose.msra.mxu0 0.0
        %772 = vmatprep.subr.mxu0 0.0
        %773 = vmatpush1.xpose.msra.mxu0 0.0
        %774 = vmatprep.subr.mxu0 0.0
        %775 = vmatpush1.xpose.msra.mxu0 0.0
        %776 = vmatprep.subr.mxu0 0.0
        %777 = vmatpush1.xpose.msra.mxu0 0.0
        %778 = vmatprep.subr.mxu0 0.0
        %779 = vmatpush1.xpose.msra.mxu0 0.0
        %780 = vmatprep.subr.mxu0 0.0
        %781 = vmatpush1.xpose.msra.mxu0 0.0
        %782 = vmatprep.subr.mxu0 0.0
        %783 = vmatpush1.xpose.msra.mxu0 0.0
        %784 = vmatprep.subr.mxu0 0.0
        %785 = vmatpush1.xpose.msra.mxu0 0.0
        %786 = vmatprep.subr.mxu0 0.0
        %787 = vmatpush1.xpose.msra.mxu0 0.0
        %788 = vmatprep.subr.mxu0 0.0
        %789 = vmatpush1.xpose.msra.mxu0 0.0
        %790 = vmatprep.subr.mxu0 0.0
        %791 = vmatpush1.xpose.msra.mxu0 0.0
        %792 = vmatprep.subr.mxu0 0.0
        %793 = vmatpush1.xpose.msra.mxu0 0.0
        %794 = vmatprep.subr.mxu0 0.0
        %795 = vmatpush1.xpose.msra.mxu0 0.0
        %796 = vmatprep.subr.mxu0 0.0
        %797 = vmatpush1.xpose.msra.mxu0 0.0
        %798 = vmatprep.subr.mxu0 0.0
        %799 = vmatpush1.xpose.msra.mxu0 0.0
        %800 = vmatprep.subr.mxu0 0.0
        %801 = vmatpush1.xpose.msra.mxu0 0.0
        %v802 = vand.u32 %v492, 4294901760
        %v803 = vsub.f32 %v492, %v802
        %v804 = vand.u32 %v803, 4294901760
        %805 = vmatprep.mubr.f32.mxu0 %v804
        %v806 = vand.u32 %v439, 4294901760
        %v807 = vsub.f32 %v439, %v806
        %v808 = vand.u32 %v807, 4294901760
        %809 = vmatmul.mubr.f32.gmra.mrb[0].mxu0 %v808
        %v810 = vpop.f32.mrb[0].mxu0
        %v811 = vadd.f32 %v733, %v810
        %v812 = vpop.f32.mrb[0].mxu0
        %813 = vdwg.mxu0
        %v814 = vand.u32 %v492, 4294901760
        %v815 = vsub.f32 %v492, %v814
        %v816 = vand.u32 %v815, 4294901760
        %817 = vmatprep.subr.mxu0 %v816
        %v818 = vand.u32 %v439, 4294901760
        %v819 = vsub.f32 %v439, %v818
        %v820 = vand.u32 %v819, 4294901760
        %821 = vmatpush1.xpose.msra.mxu0 %v820
        %822 = vmatprep.subr.mxu0 0.0
        %823 = vmatpush1.xpose.msra.mxu0 0.0
        %824 = vmatprep.subr.mxu0 0.0
        %825 = vmatpush1.xpose.msra.mxu0 0.0
        %826 = vmatprep.subr.mxu0 0.0
        %827 = vmatpush1.xpose.msra.mxu0 0.0
        %828 = vmatprep.subr.mxu0 0.0
        %829 = vmatpush1.xpose.msra.mxu0 0.0
        %830 = vmatprep.subr.mxu0 0.0
        %831 = vmatpush1.xpose.msra.mxu0 0.0
        %832 = vmatprep.subr.mxu0 0.0
        %833 = vmatpush1.xpose.msra.mxu0 0.0
        %834 = vmatprep.subr.mxu0 0.0
        %835 = vmatpush1.xpose.msra.mxu0 0.0
        %836 = vmatprep.subr.mxu0 0.0
        %837 = vmatpush1.xpose.msra.mxu0 0.0
        %838 = vmatprep.subr.mxu0 0.0
        %839 = vmatpush1.xpose.msra.mxu0 0.0
        %840 = vmatprep.subr.mxu0 0.0
        %841 = vmatpush1.xpose.msra.mxu0 0.0
        %842 = vmatprep.subr.mxu0 0.0
        %843 = vmatpush1.xpose.msra.mxu0 0.0
        %844 = vmatprep.subr.mxu0 0.0
        %845 = vmatpush1.xpose.msra.mxu0 0.0
        %846 = vmatprep.subr.mxu0 0.0
        %847 = vmatpush1.xpose.msra.mxu0 0.0
        %848 = vmatprep.subr.mxu0 0.0
        %849 = vmatpush1.xpose.msra.mxu0 0.0
        %850 = vmatprep.subr.mxu0 0.0
        %851 = vmatpush1.xpose.msra.mxu0 0.0
        %852 = vmatprep.subr.mxu0 0.0
        %853 = vmatpush1.xpose.msra.mxu0 0.0
        %854 = vmatprep.subr.mxu0 0.0
        %855 = vmatpush1.xpose.msra.mxu0 0.0
        %856 = vmatprep.subr.mxu0 0.0
        %857 = vmatpush1.xpose.msra.mxu0 0.0
        %858 = vmatprep.subr.mxu0 0.0
        %859 = vmatpush1.xpose.msra.mxu0 0.0
        %860 = vmatprep.subr.mxu0 0.0
        %861 = vmatpush1.xpose.msra.mxu0 0.0
        %862 = vmatprep.subr.mxu0 0.0
        %863 = vmatpush1.xpose.msra.mxu0 0.0
        %864 = vmatprep.subr.mxu0 0.0
        %865 = vmatpush1.xpose.msra.mxu0 0.0
        %866 = vmatprep.subr.mxu0 0.0
        %867 = vmatpush1.xpose.msra.mxu0 0.0
        %868 = vmatprep.subr.mxu0 0.0
        %869 = vmatpush1.xpose.msra.mxu0 0.0
        %870 = vmatprep.subr.mxu0 0.0
        %871 = vmatpush1.xpose.msra.mxu0 0.0
        %872 = vmatprep.subr.mxu0 0.0
        %873 = vmatpush1.xpose.msra.mxu0 0.0
        %874 = vmatprep.subr.mxu0 0.0
        %875 = vmatpush1.xpose.msra.mxu0 0.0
        %876 = vmatprep.subr.mxu0 0.0
        %877 = vmatpush1.xpose.msra.mxu0 0.0
        %878 = vmatprep.subr.mxu0 0.0
        %879 = vmatpush1.xpose.msra.mxu0 0.0
        %880 = vmatprep.subr.mxu0 0.0
        %881 = vmatpush1.xpose.msra.mxu0 0.0
        %882 = vmatprep.subr.mxu0 0.0
        %883 = vmatpush1.xpose.msra.mxu0 0.0
        %v884 = vand.u32 %v492, 4294901760
        %885 = vmatprep.mubr.f32.mxu0 %v884
        %v886 = vand.u32 %v439, 4294901760
        %887 = vmatmul.mubr.f32.gmra.mrb[0].mxu0 %v886
        %v888 = vpop.f32.mrb[0].mxu0
        %v889 = vadd.f32 %v811, %v888
        %v890 = vpop.f32.mrb[0].mxu0
        %891 = vdwg.mxu0
        %v892 = vand.u32 %v492, 4294901760
        %893 = vmatprep.subr.mxu0 %v892
        %v894 = vand.u32 %v439, 4294901760
        %895 = vmatpush1.xpose.msra.mxu0 %v894
        %896 = vmatprep.subr.mxu0 0.0
        %897 = vmatpush1.xpose.msra.mxu0 0.0
        %898 = vmatprep.subr.mxu0 0.0
        %899 = vmatpush1.xpose.msra.mxu0 0.0
        %900 = vmatprep.subr.mxu0 0.0
        %901 = vmatpush1.xpose.msra.mxu0 0.0
        %902 = vmatprep.subr.mxu0 0.0
        %903 = vmatpush1.xpose.msra.mxu0 0.0
        %904 = vmatprep.subr.mxu0 0.0
        %905 = vmatpush1.xpose.msra.mxu0 0.0
        %906 = vmatprep.subr.mxu0 0.0
        %907 = vmatpush1.xpose.msra.mxu0 0.0
        %908 = vmatprep.subr.mxu0 0.0
        %909 = vmatpush1.xpose.msra.mxu0 0.0
        %910 = vmatprep.subr.mxu0 0.0
        %911 = vmatpush1.xpose.msra.mxu0 0.0
        %912 = vmatprep.subr.mxu0 0.0
        %913 = vmatpush1.xpose.msra.mxu0 0.0
        %914 = vmatprep.subr.mxu0 0.0
        %915 = vmatpush1.xpose.msra.mxu0 0.0
        %916 = vmatprep.subr.mxu0 0.0
        %917 = vmatpush1.xpose.msra.mxu0 0.0
        %918 = vmatprep.subr.mxu0 0.0
        %919 = vmatpush1.xpose.msra.mxu0 0.0
        %920 = vmatprep.subr.mxu0 0.0
        %921 = vmatpush1.xpose.msra.mxu0 0.0
        %922 = vmatprep.subr.mxu0 0.0
        %923 = vmatpush1.xpose.msra.mxu0 0.0
        %924 = vmatprep.subr.mxu0 0.0
        %925 = vmatpush1.xpose.msra.mxu0 0.0
        %926 = vmatprep.subr.mxu0 0.0
        %927 = vmatpush1.xpose.msra.mxu0 0.0
        %928 = vmatprep.subr.mxu0 0.0
        %929 = vmatpush1.xpose.msra.mxu0 0.0
        %930 = vmatprep.subr.mxu0 0.0
        %931 = vmatpush1.xpose.msra.mxu0 0.0
        %932 = vmatprep.subr.mxu0 0.0
        %933 = vmatpush1.xpose.msra.mxu0 0.0
        %934 = vmatprep.subr.mxu0 0.0
        %935 = vmatpush1.xpose.msra.mxu0 0.0
        %936 = vmatprep.subr.mxu0 0.0
        %937 = vmatpush1.xpose.msra.mxu0 0.0
        %938 = vmatprep.subr.mxu0 0.0
        %939 = vmatpush1.xpose.msra.mxu0 0.0
        %940 = vmatprep.subr.mxu0 0.0
        %941 = vmatpush1.xpose.msra.mxu0 0.0
        %942 = vmatprep.subr.mxu0 0.0
        %943 = vmatpush1.xpose.msra.mxu0 0.0
        %944 = vmatprep.subr.mxu0 0.0
        %945 = vmatpush1.xpose.msra.mxu0 0.0
        %946 = vmatprep.subr.mxu0 0.0
        %947 = vmatpush1.xpose.msra.mxu0 0.0
        %948 = vmatprep.subr.mxu0 0.0
        %949 = vmatpush1.xpose.msra.mxu0 0.0
        %950 = vmatprep.subr.mxu0 0.0
        %951 = vmatpush1.xpose.msra.mxu0 0.0
        %952 = vmatprep.subr.mxu0 0.0
        %953 = vmatpush1.xpose.msra.mxu0 0.0
        %954 = vmatprep.subr.mxu0 0.0
        %955 = vmatpush1.xpose.msra.mxu0 0.0
        %956 = vmatprep.subr.mxu0 0.0
        %957 = vmatpush1.xpose.msra.mxu0 0.0
        %v958 = vand.u32 %v492, 4294901760
        %959 = vmatprep.mubr.f32.mxu0 %v958
        %v960 = vand.u32 %v439, 4294901760
        %961 = vmatmul.mubr.f32.gmra.mrb[0].mxu0 %v960
        %v962 = vpop.f32.mrb[0].mxu0
        %v963 = vadd.f32 %v889, %v962
        %v964 = vpop.f32.mrb[0].mxu0
        %965 = vdwg.mxu0
        %v966 = vadd.f32 %v490, %v963
        %vm967 = vcmask 27648
        %968 = vst.msk [vmem:[#allocation2] sm:$0xf] %vm967, %v966
        %v969 = vld [vmem:[#allocation3] sm:$0xf]
        %v971 = vcombine.high %v489, %v489
        %v973 = vand.u32 %v971, 4294901760
        %974 = vmatprep.subr.mxu0 %v973
        %v975 = vand.u32 %v489, 4294901760
        %976 = vmatpush1.xpose.msra.mxu0 %v975
        %977 = vmatprep.subr.mxu0 0.0
        %978 = vmatpush1.xpose.msra.mxu0 0.0
        %979 = vmatprep.subr.mxu0 0.0
        %980 = vmatpush1.xpose.msra.mxu0 0.0
        %981 = vmatprep.subr.mxu0 0.0
        %982 = vmatpush1.xpose.msra.mxu0 0.0
        %983 = vmatprep.subr.mxu0 0.0
        %984 = vmatpush1.xpose.msra.mxu0 0.0
        %985 = vmatprep.subr.mxu0 0.0
        %986 = vmatpush1.xpose.msra.mxu0 0.0
        %987 = vmatprep.subr.mxu0 0.0
        %988 = vmatpush1.xpose.msra.mxu0 0.0
        %989 = vmatprep.subr.mxu0 0.0
        %990 = vmatpush1.xpose.msra.mxu0 0.0
        %991 = vmatprep.subr.mxu0 0.0
        %992 = vmatpush1.xpose.msra.mxu0 0.0
        %993 = vmatprep.subr.mxu0 0.0
        %994 = vmatpush1.xpose.msra.mxu0 0.0
        %995 = vmatprep.subr.mxu0 0.0
        %996 = vmatpush1.xpose.msra.mxu0 0.0
        %997 = vmatprep.subr.mxu0 0.0
        %998 = vmatpush1.xpose.msra.mxu0 0.0
        %999 = vmatprep.subr.mxu0 0.0
        %1000 = vmatpush1.xpose.msra.mxu0 0.0
        %1001 = vmatprep.subr.mxu0 0.0
        %1002 = vmatpush1.xpose.msra.mxu0 0.0
        %1003 = vmatprep.subr.mxu0 0.0
        %1004 = vmatpush1.xpose.msra.mxu0 0.0
        %1005 = vmatprep.subr.mxu0 0.0
        %1006 = vmatpush1.xpose.msra.mxu0 0.0
        %1007 = vmatprep.subr.mxu0 0.0
        %1008 = vmatpush1.xpose.msra.mxu0 0.0
        %1009 = vmatprep.subr.mxu0 0.0
        %1010 = vmatpush1.xpose.msra.mxu0 0.0
        %1011 = vmatprep.subr.mxu0 0.0
        %1012 = vmatpush1.xpose.msra.mxu0 0.0
        %1013 = vmatprep.subr.mxu0 0.0
        %1014 = vmatpush1.xpose.msra.mxu0 0.0
        %1015 = vmatprep.subr.mxu0 0.0
        %1016 = vmatpush1.xpose.msra.mxu0 0.0
        %1017 = vmatprep.subr.mxu0 0.0
        %1018 = vmatpush1.xpose.msra.mxu0 0.0
        %1019 = vmatprep.subr.mxu0 0.0
        %1020 = vmatpush1.xpose.msra.mxu0 0.0
        %1021 = vmatprep.subr.mxu0 0.0
        %1022 = vmatpush1.xpose.msra.mxu0 0.0
        %1023 = vmatprep.subr.mxu0 0.0
        %1024 = vmatpush1.xpose.msra.mxu0 0.0
        %1025 = vmatprep.subr.mxu0 0.0
        %1026 = vmatpush1.xpose.msra.mxu0 0.0
        %1027 = vmatprep.subr.mxu0 0.0
        %1028 = vmatpush1.xpose.msra.mxu0 0.0
        %1029 = vmatprep.subr.mxu0 0.0
        %1030 = vmatpush1.xpose.msra.mxu0 0.0
        %1031 = vmatprep.subr.mxu0 0.0
        %1032 = vmatpush1.xpose.msra.mxu0 0.0
        %1033 = vmatprep.subr.mxu0 0.0
        %1034 = vmatpush1.xpose.msra.mxu0 0.0
        %1035 = vmatprep.subr.mxu0 0.0
        %1036 = vmatpush1.xpose.msra.mxu0 0.0
        %1037 = vmatprep.subr.mxu0 0.0
        %1038 = vmatpush1.xpose.msra.mxu0 0.0
        %v1039 = vand.u32 %v971, 4294901760
        %v1040 = vsub.f32 %v971, %v1039
        %v1041 = vand.u32 %v1040, 4294901760
        %v1042 = vsub.f32 %v1040, %v1041
        %v1043 = vand.u32 %v1042, 4294901760
        %1044 = vmatprep.mubr.f32.mxu0 %v1043
        %v1045 = vand.u32 %v489, 4294901760
        %v1046 = vsub.f32 %v489, %v1045
        %v1047 = vand.u32 %v1046, 4294901760
        %v1048 = vsub.f32 %v1046, %v1047
        %v1049 = vand.u32 %v1048, 4294901760
        %1050 = vmatmul.mubr.f32.gmra.mrb[0].mxu0 %v1049
        %v1051 = vpop.f32.mrb[0].mxu0
        %v1052 = vadd.f32 0.0, %v1051
        %v1053 = vpop.f32.mrb[0].mxu0
        %1054 = vdwg.mxu0
        %v1055 = vand.u32 %v971, 4294901760
        %v1056 = vsub.f32 %v971, %v1055
        %v1057 = vand.u32 %v1056, 4294901760
        %v1058 = vsub.f32 %v1056, %v1057
        %v1059 = vand.u32 %v1058, 4294901760
        %1060 = vmatprep.subr.mxu0 %v1059
        %v1061 = vand.u32 %v489, 4294901760
        %v1062 = vsub.f32 %v489, %v1061
        %v1063 = vand.u32 %v1062, 4294901760
        %v1064 = vsub.f32 %v1062, %v1063
        %v1065 = vand.u32 %v1064, 4294901760
        %1066 = vmatpush1.xpose.msra.mxu0 %v1065
        %1067 = vmatprep.subr.mxu0 0.0
        %1068 = vmatpush1.xpose.msra.mxu0 0.0
        %1069 = vmatprep.subr.mxu0 0.0
        %1070 = vmatpush1.xpose.msra.mxu0 0.0
        %1071 = vmatprep.subr.mxu0 0.0
        %1072 = vmatpush1.xpose.msra.mxu0 0.0
        %1073 = vmatprep.subr.mxu0 0.0
        %1074 = vmatpush1.xpose.msra.mxu0 0.0
        %1075 = vmatprep.subr.mxu0 0.0
        %1076 = vmatpush1.xpose.msra.mxu0 0.0
        %1077 = vmatprep.subr.mxu0 0.0
        %1078 = vmatpush1.xpose.msra.mxu0 0.0
        %1079 = vmatprep.subr.mxu0 0.0
        %1080 = vmatpush1.xpose.msra.mxu0 0.0
        %1081 = vmatprep.subr.mxu0 0.0
        %1082 = vmatpush1.xpose.msra.mxu0 0.0
        %1083 = vmatprep.subr.mxu0 0.0
        %1084 = vmatpush1.xpose.msra.mxu0 0.0
        %1085 = vmatprep.subr.mxu0 0.0
        %1086 = vmatpush1.xpose.msra.mxu0 0.0
        %1087 = vmatprep.subr.mxu0 0.0
        %1088 = vmatpush1.xpose.msra.mxu0 0.0
        %1089 = vmatprep.subr.mxu0 0.0
        %1090 = vmatpush1.xpose.msra.mxu0 0.0
        %1091 = vmatprep.subr.mxu0 0.0
        %1092 = vmatpush1.xpose.msra.mxu0 0.0
        %1093 = vmatprep.subr.mxu0 0.0
        %1094 = vmatpush1.xpose.msra.mxu0 0.0
        %1095 = vmatprep.subr.mxu0 0.0
        %1096 = vmatpush1.xpose.msra.mxu0 0.0
        %1097 = vmatprep.subr.mxu0 0.0
        %1098 = vmatpush1.xpose.msra.mxu0 0.0
        %1099 = vmatprep.subr.mxu0 0.0
        %1100 = vmatpush1.xpose.msra.mxu0 0.0
        %1101 = vmatprep.subr.mxu0 0.0
        %1102 = vmatpush1.xpose.msra.mxu0 0.0
        %1103 = vmatprep.subr.mxu0 0.0
        %1104 = vmatpush1.xpose.msra.mxu0 0.0
        %1105 = vmatprep.subr.mxu0 0.0
        %1106 = vmatpush1.xpose.msra.mxu0 0.0
        %1107 = vmatprep.subr.mxu0 0.0
        %1108 = vmatpush1.xpose.msra.mxu0 0.0
        %1109 = vmatprep.subr.mxu0 0.0
        %1110 = vmatpush1.xpose.msra.mxu0 0.0
        %1111 = vmatprep.subr.mxu0 0.0
        %1112 = vmatpush1.xpose.msra.mxu0 0.0
        %1113 = vmatprep.subr.mxu0 0.0
        %1114 = vmatpush1.xpose.msra.mxu0 0.0
        %1115 = vmatprep.subr.mxu0 0.0
        %1116 = vmatpush1.xpose.msra.mxu0 0.0
        %1117 = vmatprep.subr.mxu0 0.0
        %1118 = vmatpush1.xpose.msra.mxu0 0.0
        %1119 = vmatprep.subr.mxu0 0.0
        %1120 = vmatpush1.xpose.msra.mxu0 0.0
        %1121 = vmatprep.subr.mxu0 0.0
        %1122 = vmatpush1.xpose.msra.mxu0 0.0
        %1123 = vmatprep.subr.mxu0 0.0
        %1124 = vmatpush1.xpose.msra.mxu0 0.0
        %1125 = vmatprep.subr.mxu0 0.0
        %1126 = vmatpush1.xpose.msra.mxu0 0.0
        %1127 = vmatprep.subr.mxu0 0.0
        %1128 = vmatpush1.xpose.msra.mxu0 0.0
        %v1129 = vand.u32 %v971, 4294901760
        %1130 = vmatprep.mubr.f32.mxu0 %v1129
        %v1131 = vand.u32 %v489, 4294901760
        %1132 = vmatmul.mubr.f32.gmra.mrb[0].mxu0 %v1131
        %v1133 = vpop.f32.mrb[0].mxu0
        %v1134 = vadd.f32 %v1052, %v1133
        %v1135 = vpop.f32.mrb[0].mxu0
        %1136 = vdwg.mxu0
        %v1137 = vand.u32 %v971, 4294901760
        %v1138 = vsub.f32 %v971, %v1137
        %1139 = vmatprep.subr.mxu0 %v1138
        %v1140 = vand.u32 %v489, 4294901760
        %v1141 = vsub.f32 %v489, %v1140
        %1142 = vmatpush1.xpose.msra.mxu0 %v1141
        %1143 = vmatprep.subr.mxu0 0.0
        %1144 = vmatpush1.xpose.msra.mxu0 0.0
        %1145 = vmatprep.subr.mxu0 0.0
        %1146 = vmatpush1.xpose.msra.mxu0 0.0
        %1147 = vmatprep.subr.mxu0 0.0
        %1148 = vmatpush1.xpose.msra.mxu0 0.0
        %1149 = vmatprep.subr.mxu0 0.0
        %1150 = vmatpush1.xpose.msra.mxu0 0.0
        %1151 = vmatprep.subr.mxu0 0.0
        %1152 = vmatpush1.xpose.msra.mxu0 0.0
        %1153 = vmatprep.subr.mxu0 0.0
        %1154 = vmatpush1.xpose.msra.mxu0 0.0
        %1155 = vmatprep.subr.mxu0 0.0
        %1156 = vmatpush1.xpose.msra.mxu0 0.0
        %1157 = vmatprep.subr.mxu0 0.0
        %1158 = vmatpush1.xpose.msra.mxu0 0.0
        %1159 = vmatprep.subr.mxu0 0.0
        %1160 = vmatpush1.xpose.msra.mxu0 0.0
        %1161 = vmatprep.subr.mxu0 0.0
        %1162 = vmatpush1.xpose.msra.mxu0 0.0
        %1163 = vmatprep.subr.mxu0 0.0
        %1164 = vmatpush1.xpose.msra.mxu0 0.0
        %1165 = vmatprep.subr.mxu0 0.0
        %1166 = vmatpush1.xpose.msra.mxu0 0.0
        %1167 = vmatprep.subr.mxu0 0.0
        %1168 = vmatpush1.xpose.msra.mxu0 0.0
        %1169 = vmatprep.subr.mxu0 0.0
        %1170 = vmatpush1.xpose.msra.mxu0 0.0
        %1171 = vmatprep.subr.mxu0 0.0
        %1172 = vmatpush1.xpose.msra.mxu0 0.0
        %1173 = vmatprep.subr.mxu0 0.0
        %1174 = vmatpush1.xpose.msra.mxu0 0.0
        %1175 = vmatprep.subr.mxu0 0.0
        %1176 = vmatpush1.xpose.msra.mxu0 0.0
        %1177 = vmatprep.subr.mxu0 0.0
        %1178 = vmatpush1.xpose.msra.mxu0 0.0
        %1179 = vmatprep.subr.mxu0 0.0
        %1180 = vmatpush1.xpose.msra.mxu0 0.0
        %1181 = vmatprep.subr.mxu0 0.0
        %1182 = vmatpush1.xpose.msra.mxu0 0.0
        %1183 = vmatprep.subr.mxu0 0.0
        %1184 = vmatpush1.xpose.msra.mxu0 0.0
        %1185 = vmatprep.subr.mxu0 0.0
        %1186 = vmatpush1.xpose.msra.mxu0 0.0
        %1187 = vmatprep.subr.mxu0 0.0
        %1188 = vmatpush1.xpose.msra.mxu0 0.0
        %1189 = vmatprep.subr.mxu0 0.0
        %1190 = vmatpush1.xpose.msra.mxu0 0.0
        %1191 = vmatprep.subr.mxu0 0.0
        %1192 = vmatpush1.xpose.msra.mxu0 0.0
        %1193 = vmatprep.subr.mxu0 0.0
        %1194 = vmatpush1.xpose.msra.mxu0 0.0
        %1195 = vmatprep.subr.mxu0 0.0
        %1196 = vmatpush1.xpose.msra.mxu0 0.0
        %1197 = vmatprep.subr.mxu0 0.0
        %1198 = vmatpush1.xpose.msra.mxu0 0.0
        %1199 = vmatprep.subr.mxu0 0.0
        %1200 = vmatpush1.xpose.msra.mxu0 0.0
        %1201 = vmatprep.subr.mxu0 0.0
        %1202 = vmatpush1.xpose.msra.mxu0 0.0
        %1203 = vmatprep.subr.mxu0 0.0
        %1204 = vmatpush1.xpose.msra.mxu0 0.0
        %v1205 = vand.u32 %v971, 4294901760
        %v1206 = vsub.f32 %v971, %v1205
        %1207 = vmatprep.mubr.f32.mxu0 %v1206
        %v1208 = vand.u32 %v489, 4294901760
        %v1209 = vsub.f32 %v489, %v1208
        %1210 = vmatmul.mubr.f32.gmra.mrb[0].mxu0 %v1209
        %v1211 = vpop.f32.mrb[0].mxu0
        %v1212 = vadd.f32 %v1134, %v1211
        %v1213 = vpop.f32.mrb[0].mxu0
        %1214 = vdwg.mxu0
        %v1215 = vand.u32 %v971, 4294901760
        %1216 = vmatprep.subr.mxu0 %v1215
        %v1217 = vand.u32 %v489, 4294901760
        %1218 = vmatpush1.xpose.msra.mxu0 %v1217
        %1219 = vmatprep.subr.mxu0 0.0
        %1220 = vmatpush1.xpose.msra.mxu0 0.0
        %1221 = vmatprep.subr.mxu0 0.0
        %1222 = vmatpush1.xpose.msra.mxu0 0.0
        %1223 = vmatprep.subr.mxu0 0.0
        %1224 = vmatpush1.xpose.msra.mxu0 0.0
        %1225 = vmatprep.subr.mxu0 0.0
        %1226 = vmatpush1.xpose.msra.mxu0 0.0
        %1227 = vmatprep.subr.mxu0 0.0
        %1228 = vmatpush1.xpose.msra.mxu0 0.0
        %1229 = vmatprep.subr.mxu0 0.0
        %1230 = vmatpush1.xpose.msra.mxu0 0.0
        %1231 = vmatprep.subr.mxu0 0.0
        %1232 = vmatpush1.xpose.msra.mxu0 0.0
        %1233 = vmatprep.subr.mxu0 0.0
        %1234 = vmatpush1.xpose.msra.mxu0 0.0
        %1235 = vmatprep.subr.mxu0 0.0
        %1236 = vmatpush1.xpose.msra.mxu0 0.0
        %1237 = vmatprep.subr.mxu0 0.0
        %1238 = vmatpush1.xpose.msra.mxu0 0.0
        %1239 = vmatprep.subr.mxu0 0.0
        %1240 = vmatpush1.xpose.msra.mxu0 0.0
        %1241 = vmatprep.subr.mxu0 0.0
        %1242 = vmatpush1.xpose.msra.mxu0 0.0
        %1243 = vmatprep.subr.mxu0 0.0
        %1244 = vmatpush1.xpose.msra.mxu0 0.0
        %1245 = vmatprep.subr.mxu0 0.0
        %1246 = vmatpush1.xpose.msra.mxu0 0.0
        %1247 = vmatprep.subr.mxu0 0.0
        %1248 = vmatpush1.xpose.msra.mxu0 0.0
        %1249 = vmatprep.subr.mxu0 0.0
        %1250 = vmatpush1.xpose.msra.mxu0 0.0
        %1251 = vmatprep.subr.mxu0 0.0
        %1252 = vmatpush1.xpose.msra.mxu0 0.0
        %1253 = vmatprep.subr.mxu0 0.0
        %1254 = vmatpush1.xpose.msra.mxu0 0.0
        %1255 = vmatprep.subr.mxu0 0.0
        %1256 = vmatpush1.xpose.msra.mxu0 0.0
        %1257 = vmatprep.subr.mxu0 0.0
        %1258 = vmatpush1.xpose.msra.mxu0 0.0
        %1259 = vmatprep.subr.mxu0 0.0
        %1260 = vmatpush1.xpose.msra.mxu0 0.0
        %1261 = vmatprep.subr.mxu0 0.0
        %1262 = vmatpush1.xpose.msra.mxu0 0.0
        %1263 = vmatprep.subr.mxu0 0.0
        %1264 = vmatpush1.xpose.msra.mxu0 0.0
        %1265 = vmatprep.subr.mxu0 0.0
        %1266 = vmatpush1.xpose.msra.mxu0 0.0
        %1267 = vmatprep.subr.mxu0 0.0
        %1268 = vmatpush1.xpose.msra.mxu0 0.0
        %1269 = vmatprep.subr.mxu0 0.0
        %1270 = vmatpush1.xpose.msra.mxu0 0.0
        %1271 = vmatprep.subr.mxu0 0.0
        %1272 = vmatpush1.xpose.msra.mxu0 0.0
        %1273 = vmatprep.subr.mxu0 0.0
        %1274 = vmatpush1.xpose.msra.mxu0 0.0
        %1275 = vmatprep.subr.mxu0 0.0
        %1276 = vmatpush1.xpose.msra.mxu0 0.0
        %1277 = vmatprep.subr.mxu0 0.0
        %1278 = vmatpush1.xpose.msra.mxu0 0.0
        %1279 = vmatprep.subr.mxu0 0.0
        %1280 = vmatpush1.xpose.msra.mxu0 0.0
        %v1281 = vand.u32 %v971, 4294901760
        %v1282 = vsub.f32 %v971, %v1281
        %v1283 = vand.u32 %v1282, 4294901760
        %1284 = vmatprep.mubr.f32.mxu0 %v1283
        %v1285 = vand.u32 %v489, 4294901760
        %v1286 = vsub.f32 %v489, %v1285
        %v1287 = vand.u32 %v1286, 4294901760
        %1288 = vmatmul.mubr.f32.gmra.mrb[0].mxu0 %v1287
        %v1289 = vpop.f32.mrb[0].mxu0
        %v1290 = vadd.f32 %v1212, %v1289
        %v1291 = vpop.f32.mrb[0].mxu0
        %1292 = vdwg.mxu0
        %v1293 = vand.u32 %v971, 4294901760
        %v1294 = vsub.f32 %v971, %v1293
        %v1295 = vand.u32 %v1294, 4294901760
        %1296 = vmatprep.subr.mxu0 %v1295
        %v1297 = vand.u32 %v489, 4294901760
        %v1298 = vsub.f32 %v489, %v1297
        %v1299 = vand.u32 %v1298, 4294901760
        %1300 = vmatpush1.xpose.msra.mxu0 %v1299
        %1301 = vmatprep.subr.mxu0 0.0
        %1302 = vmatpush1.xpose.msra.mxu0 0.0
        %1303 = vmatprep.subr.mxu0 0.0
        %1304 = vmatpush1.xpose.msra.mxu0 0.0
        %1305 = vmatprep.subr.mxu0 0.0
        %1306 = vmatpush1.xpose.msra.mxu0 0.0
        %1307 = vmatprep.subr.mxu0 0.0
        %1308 = vmatpush1.xpose.msra.mxu0 0.0
        %1309 = vmatprep.subr.mxu0 0.0
        %1310 = vmatpush1.xpose.msra.mxu0 0.0
        %1311 = vmatprep.subr.mxu0 0.0
        %1312 = vmatpush1.xpose.msra.mxu0 0.0
        %1313 = vmatprep.subr.mxu0 0.0
        %1314 = vmatpush1.xpose.msra.mxu0 0.0
        %1315 = vmatprep.subr.mxu0 0.0
        %1316 = vmatpush1.xpose.msra.mxu0 0.0
        %1317 = vmatprep.subr.mxu0 0.0
        %1318 = vmatpush1.xpose.msra.mxu0 0.0
        %1319 = vmatprep.subr.mxu0 0.0
        %1320 = vmatpush1.xpose.msra.mxu0 0.0
        %1321 = vmatprep.subr.mxu0 0.0
        %1322 = vmatpush1.xpose.msra.mxu0 0.0
        %1323 = vmatprep.subr.mxu0 0.0
        %1324 = vmatpush1.xpose.msra.mxu0 0.0
        %1325 = vmatprep.subr.mxu0 0.0
        %1326 = vmatpush1.xpose.msra.mxu0 0.0
        %1327 = vmatprep.subr.mxu0 0.0
        %1328 = vmatpush1.xpose.msra.mxu0 0.0
        %1329 = vmatprep.subr.mxu0 0.0
        %1330 = vmatpush1.xpose.msra.mxu0 0.0
        %1331 = vmatprep.subr.mxu0 0.0
        %1332 = vmatpush1.xpose.msra.mxu0 0.0
        %1333 = vmatprep.subr.mxu0 0.0
        %1334 = vmatpush1.xpose.msra.mxu0 0.0
        %1335 = vmatprep.subr.mxu0 0.0
        %1336 = vmatpush1.xpose.msra.mxu0 0.0
        %1337 = vmatprep.subr.mxu0 0.0
        %1338 = vmatpush1.xpose.msra.mxu0 0.0
        %1339 = vmatprep.subr.mxu0 0.0
        %1340 = vmatpush1.xpose.msra.mxu0 0.0
        %1341 = vmatprep.subr.mxu0 0.0
        %1342 = vmatpush1.xpose.msra.mxu0 0.0
        %1343 = vmatprep.subr.mxu0 0.0
        %1344 = vmatpush1.xpose.msra.mxu0 0.0
        %1345 = vmatprep.subr.mxu0 0.0
        %1346 = vmatpush1.xpose.msra.mxu0 0.0
        %1347 = vmatprep.subr.mxu0 0.0
        %1348 = vmatpush1.xpose.msra.mxu0 0.0
        %1349 = vmatprep.subr.mxu0 0.0
        %1350 = vmatpush1.xpose.msra.mxu0 0.0
        %1351 = vmatprep.subr.mxu0 0.0
        %1352 = vmatpush1.xpose.msra.mxu0 0.0
        %1353 = vmatprep.subr.mxu0 0.0
        %1354 = vmatpush1.xpose.msra.mxu0 0.0
        %1355 = vmatprep.subr.mxu0 0.0
        %1356 = vmatpush1.xpose.msra.mxu0 0.0
        %1357 = vmatprep.subr.mxu0 0.0
        %1358 = vmatpush1.xpose.msra.mxu0 0.0
        %1359 = vmatprep.subr.mxu0 0.0
        %1360 = vmatpush1.xpose.msra.mxu0 0.0
        %1361 = vmatprep.subr.mxu0 0.0
        %1362 = vmatpush1.xpose.msra.mxu0 0.0
        %v1363 = vand.u32 %v971, 4294901760
        %1364 = vmatprep.mubr.f32.mxu0 %v1363
        %v1365 = vand.u32 %v489, 4294901760
        %1366 = vmatmul.mubr.f32.gmra.mrb[0].mxu0 %v1365
        %v1367 = vpop.f32.mrb[0].mxu0
        %v1368 = vadd.f32 %v1290, %v1367
        %v1369 = vpop.f32.mrb[0].mxu0
        %1370 = vdwg.mxu0
        %v1371 = vand.u32 %v971, 4294901760
        %1372 = vmatprep.subr.mxu0 %v1371
        %v1373 = vand.u32 %v489, 4294901760
        %1374 = vmatpush1.xpose.msra.mxu0 %v1373
        %1375 = vmatprep.subr.mxu0 0.0
        %1376 = vmatpush1.xpose.msra.mxu0 0.0
        %1377 = vmatprep.subr.mxu0 0.0
        %1378 = vmatpush1.xpose.msra.mxu0 0.0
        %1379 = vmatprep.subr.mxu0 0.0
        %1380 = vmatpush1.xpose.msra.mxu0 0.0
        %1381 = vmatprep.subr.mxu0 0.0
        %1382 = vmatpush1.xpose.msra.mxu0 0.0
        %1383 = vmatprep.subr.mxu0 0.0
        %1384 = vmatpush1.xpose.msra.mxu0 0.0
        %1385 = vmatprep.subr.mxu0 0.0
        %1386 = vmatpush1.xpose.msra.mxu0 0.0
        %1387 = vmatprep.subr.mxu0 0.0
        %1388 = vmatpush1.xpose.msra.mxu0 0.0
        %1389 = vmatprep.subr.mxu0 0.0
        %1390 = vmatpush1.xpose.msra.mxu0 0.0
        %1391 = vmatprep.subr.mxu0 0.0
        %1392 = vmatpush1.xpose.msra.mxu0 0.0
        %1393 = vmatprep.subr.mxu0 0.0
        %1394 = vmatpush1.xpose.msra.mxu0 0.0
        %1395 = vmatprep.subr.mxu0 0.0
        %1396 = vmatpush1.xpose.msra.mxu0 0.0
        %1397 = vmatprep.subr.mxu0 0.0
        %1398 = vmatpush1.xpose.msra.mxu0 0.0
        %1399 = vmatprep.subr.mxu0 0.0
        %1400 = vmatpush1.xpose.msra.mxu0 0.0
        %1401 = vmatprep.subr.mxu0 0.0
        %1402 = vmatpush1.xpose.msra.mxu0 0.0
        %1403 = vmatprep.subr.mxu0 0.0
        %1404 = vmatpush1.xpose.msra.mxu0 0.0
        %1405 = vmatprep.subr.mxu0 0.0
        %1406 = vmatpush1.xpose.msra.mxu0 0.0
        %1407 = vmatprep.subr.mxu0 0.0
        %1408 = vmatpush1.xpose.msra.mxu0 0.0
        %1409 = vmatprep.subr.mxu0 0.0
        %1410 = vmatpush1.xpose.msra.mxu0 0.0
        %1411 = vmatprep.subr.mxu0 0.0
        %1412 = vmatpush1.xpose.msra.mxu0 0.0
        %1413 = vmatprep.subr.mxu0 0.0
        %1414 = vmatpush1.xpose.msra.mxu0 0.0
        %1415 = vmatprep.subr.mxu0 0.0
        %1416 = vmatpush1.xpose.msra.mxu0 0.0
        %1417 = vmatprep.subr.mxu0 0.0
        %1418 = vmatpush1.xpose.msra.mxu0 0.0
        %1419 = vmatprep.subr.mxu0 0.0
        %1420 = vmatpush1.xpose.msra.mxu0 0.0
        %1421 = vmatprep.subr.mxu0 0.0
        %1422 = vmatpush1.xpose.msra.mxu0 0.0
        %1423 = vmatprep.subr.mxu0 0.0
        %1424 = vmatpush1.xpose.msra.mxu0 0.0
        %1425 = vmatprep.subr.mxu0 0.0
        %1426 = vmatpush1.xpose.msra.mxu0 0.0
        %1427 = vmatprep.subr.mxu0 0.0
        %1428 = vmatpush1.xpose.msra.mxu0 0.0
        %1429 = vmatprep.subr.mxu0 0.0
        %1430 = vmatpush1.xpose.msra.mxu0 0.0
        %1431 = vmatprep.subr.mxu0 0.0
        %1432 = vmatpush1.xpose.msra.mxu0 0.0
        %1433 = vmatprep.subr.mxu0 0.0
        %1434 = vmatpush1.xpose.msra.mxu0 0.0
        %1435 = vmatprep.subr.mxu0 0.0
        %1436 = vmatpush1.xpose.msra.mxu0 0.0
        %v1437 = vand.u32 %v971, 4294901760
        %1438 = vmatprep.mubr.f32.mxu0 %v1437
        %v1439 = vand.u32 %v489, 4294901760
        %1440 = vmatmul.mubr.f32.gmra.mrb[0].mxu0 %v1439
        %v1441 = vpop.f32.mrb[0].mxu0
        %v1442 = vadd.f32 %v1368, %v1441
        %v1443 = vpop.f32.mrb[0].mxu0
        %1444 = vdwg.mxu0
        %v1445 = vadd.f32 %v969, %v1442
        %1446 = vst.msk [vmem:[#allocation3] sm:$0xf] %vm967, %v1445
        %s1447 = sld [smem:[#allocation5]]
        %v1448 = vstv %s1447
        %v1449 = vrcp.pop %v1448
        %s1450 = vtos %v1449
        %s1451 = sld [smem:[#allocation5 + $0x1]]
        %v1452 = vstv %s1451
        %v1453 = vrcp.pop %v1452
        %s1454 = vtos %v1453
        %v1455 = vstv %s1450
        %v1456 = vmul.f32 %v387, %v1455
        %v1457 = vstv %s1454
        %v1458 = vmul.f32 %v388, %v1457
        %v1460 = vcombine.high %v1456, %v1456
        %v1462 = vsel %vm392, %v1456, -inf
        %v1463 = vrot.slane %v1462, 4
        %v1464 = vmax.f32 %v1462, %v1463
        %v1465 = vrot.slane %v1464, 2
        %v1466 = vmax.f32 %v1464, %v1465
        %v1467 = vrot.slane %v1466, 1
        %v1468 = vmax.f32 %v1466, %v1467
        %v1469 = vsel %vm392, %v1460, -inf
        %v1470 = vrot.slane %v1469, 4
        %v1471 = vmax.f32 %v1469, %v1470
        %v1472 = vrot.slane %v1471, 2
        %v1473 = vmax.f32 %v1471, %v1472
        %v1474 = vrot.slane %v1473, 1
        %v1475 = vmax.f32 %v1473, %v1474
        %v1478 = vcombine.low %v1468, %v1475
        %v1480 = vsub.f32 %v1456, %v1478
        %v1481 = vmul.f32 %v1480, 1.442695
        %v1482 = vpow.pop %v1481
        %v1484 = vcombine.high %v1482, %v1482
        %v1486 = vsel %vm392, %v1482, 0.0
        %v1487 = vrot.slane %v1486, 4
        %v1488 = vadd.f32 %v1486, %v1487
        %v1489 = vrot.slane %v1488, 2
        %v1490 = vadd.f32 %v1488, %v1489
        %v1491 = vrot.slane %v1490, 1
        %v1492 = vadd.f32 %v1490, %v1491
        %v1493 = vsel %vm392, %v1484, 0.0
        %v1494 = vrot.slane %v1493, 4
        %v1495 = vadd.f32 %v1493, %v1494
        %v1496 = vrot.slane %v1495, 2
        %v1497 = vadd.f32 %v1495, %v1496
        %v1498 = vrot.slane %v1497, 1
        %v1499 = vadd.f32 %v1497, %v1498
        %v1500 = vlog2.pop %v1492
        %v1501 = vmul.f32 %v1500, 0.6931472
        %v1502 = vlog2.pop %v1499
        %v1503 = vmul.f32 %v1502, 0.6931472
        %v1504 = vadd.f32 %v1468, %v1501
        %v1505 = vadd.f32 %v1475, %v1503
        %v1507 = vcombine.high %v1458, %v1458
        %v1509 = vsel %vm392, %v1458, -inf
        %v1510 = vrot.slane %v1509, 4
        %v1511 = vmax.f32 %v1509, %v1510
        %v1512 = vrot.slane %v1511, 2
        %v1513 = vmax.f32 %v1511, %v1512
        %v1514 = vrot.slane %v1513, 1
        %v1515 = vmax.f32 %v1513, %v1514
        %v1516 = vsel %vm392, %v1507, -inf
        %v1517 = vrot.slane %v1516, 4
        %v1518 = vmax.f32 %v1516, %v1517
        %v1519 = vrot.slane %v1518, 2
        %v1520 = vmax.f32 %v1518, %v1519
        %v1521 = vrot.slane %v1520, 1
        %v1522 = vmax.f32 %v1520, %v1521
        %v1525 = vcombine.low %v1515, %v1522
        %v1527 = vsub.f32 %v1458, %v1525
        %v1528 = vmul.f32 %v1527, 1.442695
        %v1529 = vpow.pop %v1528
        %v1531 = vcombine.high %v1529, %v1529
        %v1533 = vsel %vm392, %v1529, 0.0
        %v1534 = vrot.slane %v1533, 4
        %v1535 = vadd.f32 %v1533, %v1534
        %v1536 = vrot.slane %v1535, 2
        %v1537 = vadd.f32 %v1535, %v1536
        %v1538 = vrot.slane %v1537, 1
        %v1539 = vadd.f32 %v1537, %v1538
        %v1540 = vsel %vm392, %v1531, 0.0
        %v1541 = vrot.slane %v1540, 4
        %v1542 = vadd.f32 %v1540, %v1541
        %v1543 = vrot.slane %v1542, 2
        %v1544 = vadd.f32 %v1542, %v1543
        %v1545 = vrot.slane %v1544, 1
        %v1546 = vadd.f32 %v1544, %v1545
        %v1547 = vrcp.pop %v1539
        %v1548 = vmul.f32 1.0, %v1547
        %v1549 = vrcp.pop %v1546
        %v1550 = vmul.f32 1.0, %v1549
        %v1553 = vcombine.low %v1548, %v1550
        %v1555 = vmul.f32 %v1529, %v1553
        %v1556 = vmul.f32 %v1555, %v1456
        %v1558 = vcombine.high %v1556, %v1556
        %v1560 = vsel %vm392, %v1556, 0.0
        %v1561 = vrot.slane %v1560, 4
        %v1562 = vadd.f32 %v1560, %v1561
        %v1563 = vrot.slane %v1562, 2
        %v1564 = vadd.f32 %v1562, %v1563
        %v1565 = vrot.slane %v1564, 1
        %v1566 = vadd.f32 %v1564, %v1565
        %v1567 = vsel %vm392, %v1558, 0.0
        %v1568 = vrot.slane %v1567, 4
        %v1569 = vadd.f32 %v1567, %v1568
        %v1570 = vrot.slane %v1569, 2
        %v1571 = vadd.f32 %v1569, %v1570
        %v1572 = vrot.slane %v1571, 1
        %v1573 = vadd.f32 %v1571, %v1572
        %v1574 = vsub.f32 %v1504, %v1566
        %v1575 = vsub.f32 %v1505, %v1573
        %v1576 = vld [vmem:[#allocation4] sm:$0x3]
        %v1579 = vcombine.low %v1574, %v1575
        %v1581 = vunpack.c.l.s4 1966171168
        %v1582 = vunpack.c.0.s8 %v1581
        %v1583 = vlaneseq
        %v1584 = vshrl.u32 %v1583, 7
        %v1585 = vsub.s32 %v1582, %v1584
        %v1586 = vrot.slane %v1579, %v1585
        %v1588 = vunpack.c.l.s4 1966171168
        %v1589 = vunpack.c.0.s8 %v1588
        %v1590 = vlaneseq
        %v1591 = vshrl.u32 %v1590, 7
        %v1592 = vsub.s32 %v1589, %v1591
        %v1593 = vrot.slane %v1586, %v1592
        %v1595 = vadd.f32 %v1576, %v1593
        %v1596 = vlaneseq
        %vm1597 = vcmp.ge.s32.totalorder %v1596, 0
        %vm1598 = vcmp.lt.s32.totalorder %v1596, 256
        %vm1599 = vmand %vm1597, %vm1598
        %1600 = vst.msk [vmem:[#allocation4] sm:$0x3] %vm1599, %v1595
        // Predicated region
        $region49: #{tpu_custom_call.1} parent=31 // pred_check
          %p1601 = pneg %p375
        $region50: #{tpu_custom_call.1} parent=31 // pred_check_branch
          %1603 = sbr.rel (%p1601) target = $region52
        $region51: #{tpu_custom_call.1} parent=31 // pred_region
          %v1604 = vld [vmem:[#allocation2] sm:$0xf]
          %1605 = vst.msk [vmem:[%s345] sm:$0xf] %vm967, %v1604
          %v1606 = vld [vmem:[#allocation3] sm:$0xf]
          %1607 = vst.msk [vmem:[%s352] sm:$0xf] %vm967, %v1606
          %v1608 = vld [vmem:[#allocation4] sm:$0x3]
          %v1610 = vlaneseq
          %v1611 = vshrl.u32 %v1610, 7
          %v1612 = vsub.s32 0, %v1611
          %v1613 = vrot.slane %v1608, %v1612
          %v1614 = vlaneseq
          %v1615 = vshrl.u32 %v1614, 7
          %v1616 = vsub.s32 1, %v1615
          %v1617 = vrot.slane %v1608, %v1616
          %vm1620 = vcmask 1040384
          %v1621 = vsel %vm1620, %v1613, 0.0
          %v1622 = vsel %vm1620, %v1617, 0.0
          %v1623 = vadd.f32 %v1621, %v1622
          %1624 = vadd.xlane.f32.xlu0 %v1623
          %v1625 = vpop.xlane.xlu0 %1624
          %v1626 = vrot.slane %v1625, 4
          %v1627 = vadd.f32 %v1625, %v1626
          %v1628 = vrot.slane %v1627, 2
          %v1629 = vadd.f32 %v1627, %v1628
          %v1630 = vrot.slane %v1629, 1
          %v1631 = vadd.f32 %v1629, %v1630
          %s1632 = vtos %v1631
          %v1633 = vstv %s1632
          %vm1634 = vcmask 0
          %1635 = vst.msk [vmem:[%s374] sm:$0x1] %vm1634, %v1633
        $region52: #{tpu_custom_call.1} parent=31 // pred_fallthru
          _
        %s1636 = sand.u32 %s148, 1
        %s1637 = scalar_lea.sflag [#allocation7], %s1636
        %s1638 = sand.u32 %s148, 1
        %s1639 = smul.addr %s1638, 4
        %s1640 = scalar_lea.vmem [#allocation12], %s1639
        %s1641 = sand.u32 %s176, 1
        %s1642 = scalar_lea.sflag [#allocation14], %s1641
        %s1643 = sand.u32 %s176, 1
        %s1644 = smul.addr %s1643, 4
        %s1645 = scalar_lea.vmem [#allocation13], %s1644
        %p1646 = scmp.lt.s32.totalorder %s35, 1
        %s1647 = scalar_select %p1646, %s35, 1
        %p1648 = scmp.lt.s32.totalorder %s36, 0
        %s1649 = scalar_select %p1648, %s36, 0
        %s1650 = sadd.s32 %s1649, %s1647
        %s1651 = scalar_lea.vmem %s5, %s1650
        // Predicated region
        $region53: #{tpu_custom_call.1} parent=31 // pred_check
          %p1652 = pneg %p158
        $region54: #{tpu_custom_call.1} parent=31 // pred_check_branch
          %1654 = sbr.rel (%p1652) target = $region56
        $region55: #{tpu_custom_call.1} parent=31 // pred_region
          %s1656 = ssub.s32 64, 64
          %1657 = vsyncadd %s1637, %s1656
          %s1658 = sadd.s32 %s36, %s35
          %s1659 = smul.addr %s1658, 64
          %s1660 = scalar_lea.hbm %s3, %s1659
          %s1662 = sshll.u32 %s1640, 4
          %s1663 = int_to_ptr.vmem [resolvable:$true] %s1662
          %1665 = dma.vmem_to_hbm [thread:$0]  %s1663, 64, %s1660, %s1637
        $region56: #{tpu_custom_call.1} parent=31 // pred_fallthru
          _
        // Predicated region
        $region57: #{tpu_custom_call.1} parent=31 // pred_check
          %p1666 = pneg %p186
        $region58: #{tpu_custom_call.1} parent=31 // pred_check_branch
          %1668 = sbr.rel (%p1666) target = $region60
        $region59: #{tpu_custom_call.1} parent=31 // pred_region
          %s1670 = ssub.s32 64, 64
          %1671 = vsyncadd %s1642, %s1670
          %s1672 = sadd.s32 %s36, %s35
          %s1673 = smul.addr %s1672, 64
          %s1674 = scalar_lea.hbm %s4, %s1673
          %s1676 = sshll.u32 %s1645, 4
          %s1677 = int_to_ptr.vmem [resolvable:$true] %s1676
          %1679 = dma.vmem_to_hbm [thread:$0]  %s1677, 64, %s1674, %s1642
        $region60: #{tpu_custom_call.1} parent=31 // pred_fallthru
          _
        // Predicated region
        $region61: #{tpu_custom_call.1} parent=31 // pred_check
          %p1680 = pneg %p214
        $region62: #{tpu_custom_call.1} parent=31 // pred_check_branch
          %1682 = sbr.rel (%p1680) target = $region64
        $region63: #{tpu_custom_call.1} parent=31 // pred_region
          _
        $region64: #{tpu_custom_call.1} parent=31 // pred_fallthru
          _
      $region32: #{tpu_custom_call.1} parent=5 // pred_fallthru
        _
      %p1683 = scmp.le.s32.totalorder 2, %s25
      // Predicated region
      $region65: #{tpu_custom_call.1} parent=5 // pred_check
        %p1684 = pneg %p1683
      $region66: #{tpu_custom_call.1} parent=5 // pred_check_branch
        %1686 = sbr.rel (%p1684) target = $region68
      $region67: #{tpu_custom_call.1} parent=5 // pred_region
        %s1687 = ssub.s32 %s25, 2
        // Predicated region
        $region69: #{tpu_custom_call.1} parent=67 // pred_check
          %p1688 = pneg %p164
        $region70: #{tpu_custom_call.1} parent=67 // pred_check_branch
          %1690 = sbr.rel (%p1688) target = $region72
        $region71: #{tpu_custom_call.1} parent=67 // pred_region
          %s1691 = sand.u32 %s149, 1
          %s1692 = scalar_lea.sflag [#allocation7], %s1691
          %s1693 = sand.u32 %s149, 1
          %s1694 = smul.addr %s1693, 4
          %s1695 = scalar_lea.vmem [#allocation12], %s1694
          %1696 = dma.done %s1692, 64
        $region72: #{tpu_custom_call.1} parent=67 // pred_fallthru
          _
        // Predicated region
        $region73: #{tpu_custom_call.1} parent=67 // pred_check
          %p1697 = pneg %p192
        $region74: #{tpu_custom_call.1} parent=67 // pred_check_branch
          %1699 = sbr.rel (%p1697) target = $region76
        $region75: #{tpu_custom_call.1} parent=67 // pred_region
          %s1700 = sand.u32 %s177, 1
          %s1701 = scalar_lea.sflag [#allocation14], %s1700
          %s1702 = sand.u32 %s177, 1
          %s1703 = smul.addr %s1702, 4
          %s1704 = scalar_lea.vmem [#allocation13], %s1703
          %1705 = dma.done %s1701, 64
        $region76: #{tpu_custom_call.1} parent=67 // pred_fallthru
          _
        // Predicated region
        $region77: #{tpu_custom_call.1} parent=67 // pred_check
          %p1706 = pneg %p220
        $region78: #{tpu_custom_call.1} parent=67 // pred_check_branch
          %1708 = sbr.rel (%p1706) target = $region80
        $region79: #{tpu_custom_call.1} parent=67 // pred_region
          %p1709 = scmp.lt.s32.totalorder %s38, 1
          %s1710 = scalar_select %p1709, %s38, 1
          %p1711 = scmp.lt.s32.totalorder %s39, 0
          %s1712 = scalar_select %p1711, %s39, 0
          %s1713 = sadd.s32 %s1712, %s1710
          %s1714 = scalar_lea.vmem %s5, %s1713
        $region80: #{tpu_custom_call.1} parent=67 // pred_fallthru
          _
      $region68: #{tpu_custom_call.1} parent=5 // pred_fallthru
        _
    $region6: #{tpu_custom_call.1} parent=1 // loop_footer
      %s29 = sadd.s32 1, %s25
    $region7: #{tpu_custom_call.1} parent=1 // loop_footer_branch
      %24 = sbr.rel target = $region3
    $region8: #{tpu_custom_call.1} parent=1 // loop_exit
      _
    %1715 = vsyncpa [#allocation6], 1
    %s1716 = scalar_lea.sflag [#allocation6], 1
    %1717 = vsyncpa %s1716, 1
    %1718 = vsyncpa [#allocation11], 1
    %s1719 = scalar_lea.sflag [#allocation11], 1
    %1720 = vsyncpa %s1719, 1
    %1721 = vsyncpa [#allocation7], 1
    %s1722 = scalar_lea.sflag [#allocation7], 1
    %1723 = vsyncpa %s1722, 1
    %1724 = vsyncpa [#allocation14], 1
    %s1725 = scalar_lea.sflag [#allocation14], 1
    %1726 = vsyncpa %s1725, 1
    %1727 = vsyncpa [#allocation8], 1
    %s1728 = scalar_lea.sflag [#allocation8], 1
    %1729 = vsyncpa %s1728, 1

</llo_original>
